<compile_context>
chip_gen: v5e
topology: v5e:2x2
jax: 0.10.0
libtpu: 0.0.40
codegen_flags: <defaults>
</compile_context>

<pallas_src>
import jax
import jax.numpy as jnp
from jax.experimental import pallas as pl
from jax.experimental.pallas import tpu as pltpu

_GROUP = 8  # batch rows packed per lane-row (8 * x_size = 128 lanes for x_size=16)


def _round_up(n, m):
    return ((n + m - 1) // m) * m


def _cdiv(a, b):
    return -(-a // b)


def decoder_kernel(z_ref,
                   w0_ref, b0_ref,
                   w1_ref, b1_ref,
                   w2_ref, b2_ref,
                   o_ref):
    """Fused MLP decoder on the group-of-8 packed layout.

    All operands are lane-dense packed views; weights are block-diagonal
    (8 copies of the original W), so this is plain matmul + elementwise.
    bf16 MXU operands, f32 accumulation, f32 elementwise epilogues.
    """
    z = z_ref[...].astype(jnp.bfloat16)

    # Layer 0: Linear(z_size -> h0) + ReLU   (packed widths: 256 -> 512)
    h = jnp.dot(z, w0_ref[...], preferred_element_type=jnp.float32) + b0_ref[...]
    h = jnp.maximum(h, 0.0)

    # Layer 1: Linear(h0 -> h1) + ReLU       (packed widths: 512 -> 384)
    h = jnp.dot(h.astype(jnp.bfloat16), w1_ref[...],
                preferred_element_type=jnp.float32) + b1_ref[...]
    h = jnp.maximum(h, 0.0)

    # Layer 2: Linear(h1 -> x_size) + folded decoder bias   (384 -> 128)
    a = jnp.dot(h.astype(jnp.bfloat16), w2_ref[...],
                preferred_element_type=jnp.float32) + b2_ref[...]

    # sigmoid(a) = 1 / (1 + exp(-a)); exp and reciprocal both ride the EUP slot.
    o_ref[...] = pl.reciprocal(1.0 + jnp.exp(-a), approx=True).astype(o_ref.dtype)


def prepare_decoder_params(params, dec_bias):
    """One-time parameter prep (hoisted out of the forward hot path).

    params:   list of (W, b) with W in PyTorch layout (out, in), b (out,)
    dec_bias: (x_size,) decoder-level bias (the `self.bias` term), or None.

    Returns block-diagonal (group=8) transposed weights in bf16 and tiled
    (1, 8*out) f32 biases, with dec_bias folded into the last layer's bias.
    """
    (w0, b0), (w1, b1), (w2, b2) = params
    eye = jnp.eye(_GROUP, dtype=jnp.float32)

    def pack_w(w):  # (out, in) -> block-diag of w.T, shape (8*in, 8*out), bf16
        return jnp.kron(eye, w.T.astype(jnp.float32)).astype(jnp.bfloat16)

    def pack_b(b):  # (out,) -> (1, 8*out) f32
        return jnp.tile(b.astype(jnp.float32), _GROUP)[None, :]

    last_b = b2 if dec_bias is None else b2 + dec_bias
    return (pack_w(w0), pack_b(b0),
            pack_w(w1), pack_b(b1),
            pack_w(w2), pack_b(last_b))


def decoder_forward(z, prepped, *, tile_b=4096):
    """Fused Pallas decoder on a batch-tiled, lane-dense packed layout.

    z:       (B, z_size) float32 (bf16 also accepted)
    prepped: output of prepare_decoder_params
    tile_b:  target batch rows per grid step (large to amortize step overhead).
    """
    w0, b0, w1, b1, w2, b2 = prepped
    B, z_size = z.shape
    h0 = w0.shape[1] // _GROUP
    h1 = w1.shape[1] // _GROUP
    x_size = w2.shape[1] // _GROUP
    zp = _GROUP * z_size          # packed z width   (256)
    xp = _GROUP * x_size          # packed out width (128)

    # Pick the number of grid steps / tile size:
    #   - large tiles (target tile_b rows) so per-step overhead is negligible,
    #   - minimal padding for ragged B,
    #   - >=2 steps for big batches so v7x's two TensorCores both get work.
    n_tiles = max(1, _cdiv(B, tile_b))
    if n_tiles == 1 and B >= 1024:
        n_tiles = 2
    if n_tiles == 1:
        tb = _round_up(B, _GROUP)             # block == full array, any size ok
    else:
        tb = _round_up(_cdiv(B, n_tiles), 8 * _GROUP)  # packed rows multiple of 8
    B_pad = n_tiles * tb

    if B_pad != B:
        z = jnp.pad(z, ((0, B_pad - B), (0, 0)))

    # Free row-major reinterpretation: (B_pad, z_size) -> (B_pad/8, 8*z_size).
    z_packed = z.reshape(B_pad // _GROUP, zp)
    tp = tb // _GROUP                                   # packed rows per step

    def resident(arr):
        # Grid-invariant operand (weights/biases): constant block index, so it
        # stays resident in VMEM across grid steps.
        return pl.BlockSpec(arr.shape, lambda i: (0, 0))

    weight_bytes = sum(int(a.size) * a.dtype.itemsize for a in (w0, b0, w1, b1, w2, b2))
    cost = pl.CostEstimate(
        flops=2 * B_pad * (z_size * h0 + h0 * h1 + h1 * x_size),
        transcendentals=B_pad * x_size,
        bytes_accessed=B_pad * (z_size + x_size) * 4 + weight_bytes,
    )

    out_packed = pl.pallas_call(
        decoder_kernel,
        out_shape=jax.ShapeDtypeStruct((B_pad // _GROUP, xp), jnp.float32),
        grid_spec=pltpu.PrefetchScalarGridSpec(
            num_scalar_prefetch=0,
            grid=(n_tiles,),
            in_specs=[
                pl.BlockSpec((tp, zp), lambda i: (i, 0)),   # packed z tile
                resident(w0), resident(b0),
                resident(w1), resident(b1),
                resident(w2), resident(b2),
            ],
            out_specs=pl.BlockSpec((tp, xp), lambda i: (i, 0)),
        ),
        compiler_params=pltpu.CompilerParams(
            dimension_semantics=("parallel",)),
        cost_estimate=cost,
    )(z_packed, w0, b0, w1, b1, w2, b2)

    # Free row-major reinterpretation back to (B_pad, x_size).
    out = out_packed.reshape(B_pad, x_size)
    return out[:B] if B_pad != B else out


def decoder_reference(z, params, dec_bias):
    """Pure-JAX f32 reference matching the PyTorch forward semantics."""
    h = z
    n = len(params)
    for li, (w, b) in enumerate(params):
        h = h @ w.T + b
        if li < n - 1:               # nonlinearity between layers only
            h = jnp.maximum(h, 0.0)
    if dec_bias is not None:
        h = h + dec_bias
    return jax.nn.sigmoid(h)         # use_sigmoid=True


if __name__ == "__main__":
    # Small, deterministic config:
    #   z_size=32, h_sizes=[64, 48], x_size=16, ReLU, bias vector, sigmoid.
    z_size = 32
    h_sizes = [64, 48]
    x_size = 16

    key = jax.random.PRNGKey(0)
    keys = jax.random.split(key, 10)

    # Deterministic parameter init (PyTorch layout: W is (out, in)).
    dims_in = [z_size] + h_sizes          # [32, 64, 48]
    dims_out = h_sizes + [x_size]         # [64, 48, 16]
    params = []
    kidx = 0
    for din, dout in zip(dims_in, dims_out):
        w = 0.1 * jax.random.normal(keys[kidx], (dout, din), dtype=jnp.float32)
        b = 0.1 * jax.random.normal(keys[kidx + 1], (dout,), dtype=jnp.float32)
        params.append((w, b))
        kidx += 2

    dec_bias = 0.1 * jax.random.normal(keys[6], (x_size,), dtype=jnp.float32)

    # One-time parameter prep (transpose / block-diag / bf16 cast / bias fold).
    prepped = prepare_decoder_params(params, dec_bias)

    # Case 1: tiny batch (single grid step, pad only to a multiple of 8).
    z_small = jax.random.normal(keys[7], (8, z_size), dtype=jnp.float32)
    out_small = jax.block_until_ready(decoder_forward(z_small, prepped))
    ref_small = decoder_reference(z_small, params, dec_bias)
    assert out_small.shape == (8, x_size)
    # bf16 matmul operands + approx reciprocal -> small drift vs f32 reference.
    assert jnp.allclose(out_small, ref_small, atol=2e-2, rtol=1e-2), \
        "small-batch mismatch vs reference"

    # Case 2: ragged batch (single large tile, pad 300 -> 304 only).
    z_big = jax.random.normal(keys[8], (300, z_size), dtype=jnp.float32)
    out_big = jax.block_until_ready(decoder_forward(z_big, prepped))
    ref_big = decoder_reference(z_big, params, dec_bias)
    assert out_big.shape == (300, x_size)
    assert jnp.allclose(out_big, ref_big, atol=2e-2, rtol=1e-2), \
        "ragged-batch mismatch vs reference"

    # Case 3: larger batch exercising the multi-step "parallel" grid path
    # (>=2 steps so v7x's two TensorCores both get work).
    z_multi = jax.random.normal(keys[9], (2048, z_size), dtype=jnp.float32)
    out_multi = jax.block_until_ready(decoder_forward(z_multi, prepped))
    ref_multi = decoder_reference(z_multi, params, dec_bias)
    assert out_multi.shape == (2048, x_size)
    assert jnp.allclose(out_multi, ref_multi, atol=2e-2, rtol=1e-2), \
        "multi-tile mismatch vs reference"

    print("KERNEL_OK")
</pallas_src>

<mosaic_0001>
module attributes {stable_mosaic.version = 11 : i64} {
  func.func @decoder_kernel(%arg0: i32, %arg1: memref<1x256xf32, #tpu.memory_space<vmem>>, %arg2: memref<256x512xbf16, #tpu.memory_space<vmem>>, %arg3: memref<1x512xf32, #tpu.memory_space<vmem>>, %arg4: memref<512x384xbf16, #tpu.memory_space<vmem>>, %arg5: memref<1x384xf32, #tpu.memory_space<vmem>>, %arg6: memref<384x128xbf16, #tpu.memory_space<vmem>>, %arg7: memref<1x128xf32, #tpu.memory_space<vmem>>, %arg8: memref<1x128xf32, #tpu.memory_space<vmem>>) attributes {dimension_semantics = [#tpu.dimension_semantics<parallel>], iteration_bounds = array<i64: 1>, scalar_prefetch = 0 : i64, scratch_operands = 0 : i64, tpu.core_type = #tpu.core_type<tc>, window_params = [{transform_indices = @transform_0, window_bounds = array<i64: 1, 256>}, {pipeline_mode = #tpu.pipeline_mode<synchronous>, transform_indices = @transform_1, window_bounds = array<i64: 256, 512>}, {pipeline_mode = #tpu.pipeline_mode<synchronous>, transform_indices = @transform_2, window_bounds = array<i64: 1, 512>}, {pipeline_mode = #tpu.pipeline_mode<synchronous>, transform_indices = @transform_3, window_bounds = array<i64: 512, 384>}, {pipeline_mode = #tpu.pipeline_mode<synchronous>, transform_indices = @transform_4, window_bounds = array<i64: 1, 384>}, {pipeline_mode = #tpu.pipeline_mode<synchronous>, transform_indices = @transform_5, window_bounds = array<i64: 384, 128>}, {pipeline_mode = #tpu.pipeline_mode<synchronous>, transform_indices = @transform_6, window_bounds = array<i64: 1, 128>}, {transform_indices = @transform_7, window_bounds = array<i64: 1, 128>}]} {
    %c0 = arith.constant 0 : index
    %c0_0 = arith.constant 0 : index
    %0 = vector.load %arg1[%c0, %c0_0] : memref<1x256xf32, #tpu.memory_space<vmem>>, vector<1x256xf32>
    %1 = arith.truncf %0 : vector<1x256xf32> to vector<1x256xbf16>
    %c0_1 = arith.constant 0 : index
    %c0_2 = arith.constant 0 : index
    %2 = vector.load %arg2[%c0_1, %c0_2] : memref<256x512xbf16, #tpu.memory_space<vmem>>, vector<256x512xbf16>
    %cst = arith.constant dense<0.000000e+00> : vector<1x512xf32>
    %3 = tpu.matmul %1, %2, %cst {dimension_numbers = #tpu.dot_dimension_numbers<[1], [0], [0], [1], [0, 0, 1, 1], [], []>} : vector<1x256xbf16>, vector<256x512xbf16>, vector<1x512xf32> -> vector<1x512xf32>
    %c0_3 = arith.constant 0 : index
    %c0_4 = arith.constant 0 : index
    %4 = vector.load %arg3[%c0_3, %c0_4] : memref<1x512xf32, #tpu.memory_space<vmem>>, vector<1x512xf32>
    %5 = arith.addf %3, %4 : vector<1x512xf32>
    %cst_5 = arith.constant 0.000000e+00 : f32
    %6 = vector.broadcast %cst_5 : f32 to vector<1x512xf32>
    %7 = arith.maximumf %5, %6 : vector<1x512xf32>
    %8 = arith.truncf %7 : vector<1x512xf32> to vector<1x512xbf16>
    %c0_6 = arith.constant 0 : index
    %c0_7 = arith.constant 0 : index
    %9 = vector.load %arg4[%c0_6, %c0_7] : memref<512x384xbf16, #tpu.memory_space<vmem>>, vector<512x384xbf16>
    %cst_8 = arith.constant dense<0.000000e+00> : vector<1x384xf32>
    %10 = tpu.matmul %8, %9, %cst_8 {dimension_numbers = #tpu.dot_dimension_numbers<[1], [0], [0], [1], [0, 0, 1, 1], [], []>} : vector<1x512xbf16>, vector<512x384xbf16>, vector<1x384xf32> -> vector<1x384xf32>
    %c0_9 = arith.constant 0 : index
    %c0_10 = arith.constant 0 : index
    %11 = vector.load %arg5[%c0_9, %c0_10] : memref<1x384xf32, #tpu.memory_space<vmem>>, vector<1x384xf32>
    %12 = arith.addf %10, %11 : vector<1x384xf32>
    %cst_11 = arith.constant 0.000000e+00 : f32
    %13 = vector.broadcast %cst_11 : f32 to vector<1x384xf32>
    %14 = arith.maximumf %12, %13 : vector<1x384xf32>
    %15 = arith.truncf %14 : vector<1x384xf32> to vector<1x384xbf16>
    %c0_12 = arith.constant 0 : index
    %c0_13 = arith.constant 0 : index
    %16 = vector.load %arg6[%c0_12, %c0_13] : memref<384x128xbf16, #tpu.memory_space<vmem>>, vector<384x128xbf16>
    %cst_14 = arith.constant dense<0.000000e+00> : vector<1x128xf32>
    %17 = tpu.matmul %15, %16, %cst_14 {dimension_numbers = #tpu.dot_dimension_numbers<[1], [0], [0], [1], [0, 0, 1, 1], [], []>} : vector<1x384xbf16>, vector<384x128xbf16>, vector<1x128xf32> -> vector<1x128xf32>
    %c0_15 = arith.constant 0 : index
    %c0_16 = arith.constant 0 : index
    %18 = vector.load %arg7[%c0_15, %c0_16] : memref<1x128xf32, #tpu.memory_space<vmem>>, vector<1x128xf32>
    %19 = arith.addf %17, %18 : vector<1x128xf32>
    %cst_17 = arith.constant 0.000000e+00 : f32
    %20 = vector.broadcast %cst_17 : f32 to vector<1x128xf32>
    %21 = arith.subf %20, %19 : vector<1x128xf32>
    %22 = math.exp %21 : vector<1x128xf32>
    %cst_18 = arith.constant 1.000000e+00 : f32
    %23 = vector.broadcast %cst_18 : f32 to vector<1x128xf32>
    %24 = arith.addf %23, %22 : vector<1x128xf32>
    %25 = tpu.reciprocal %24 {approx = true} : vector<1x128xf32> -> vector<1x128xf32>
    %c0_19 = arith.constant 0 : index
    %c0_20 = arith.constant 0 : index
    %26 = vector.load %arg8[%c0_19, %c0_20] : memref<1x128xf32, #tpu.memory_space<vmem>>, vector<1x128xf32>
    tpu.vector_store %arg8[%c0_19, %c0_20], %25 {strides = array<i32>} : memref<1x128xf32, #tpu.memory_space<vmem>>, vector<1x128xf32>,
    return
  }
  func.func @transform_0(%arg0: i32) -> (i32, i32) {
    %c0_i32 = arith.constant 0 : i32
    %c0_i32_0 = arith.constant 0 : i32
    return %arg0, %c0_i32 : i32, i32
  }
  func.func @transform_1(%arg0: i32) -> (i32, i32) {
    %c0_i32 = arith.constant 0 : i32
    %c0_i32_0 = arith.constant 0 : i32
    %c0_i32_1 = arith.constant 0 : i32
    return %c0_i32, %c0_i32_0 : i32, i32
  }
  func.func @transform_2(%arg0: i32) -> (i32, i32) {
    %c0_i32 = arith.constant 0 : i32
    %c0_i32_0 = arith.constant 0 : i32
    %c0_i32_1 = arith.constant 0 : i32
    return %c0_i32, %c0_i32_0 : i32, i32
  }
  func.func @transform_3(%arg0: i32) -> (i32, i32) {
    %c0_i32 = arith.constant 0 : i32
    %c0_i32_0 = arith.constant 0 : i32
    %c0_i32_1 = arith.constant 0 : i32
    return %c0_i32, %c0_i32_0 : i32, i32
  }
  func.func @transform_4(%arg0: i32) -> (i32, i32) {
    %c0_i32 = arith.constant 0 : i32
    %c0_i32_0 = arith.constant 0 : i32
    %c0_i32_1 = arith.constant 0 : i32
    return %c0_i32, %c0_i32_0 : i32, i32
  }
  func.func @transform_5(%arg0: i32) -> (i32, i32) {
    %c0_i32 = arith.constant 0 : i32
    %c0_i32_0 = arith.constant 0 : i32
    %c0_i32_1 = arith.constant 0 : i32
    return %c0_i32, %c0_i32_0 : i32, i32
  }
  func.func @transform_6(%arg0: i32) -> (i32, i32) {
    %c0_i32 = arith.constant 0 : i32
    %c0_i32_0 = arith.constant 0 : i32
    %c0_i32_1 = arith.constant 0 : i32
    return %c0_i32, %c0_i32_0 : i32, i32
  }
  func.func @transform_7(%arg0: i32) -> (i32, i32) {
    %c0_i32 = arith.constant 0 : i32
    %c0_i32_0 = arith.constant 0 : i32
    return %arg0, %c0_i32 : i32, i32
  }
}

</mosaic_0001>

<llo_original>
// kernel: tpu_custom_call.1
$region0: #{tpu_custom_call.1}
  #allocation0 [shape = 'u32[]', space=smem, size = 0x4, offset = 0x4, fixed_abs, tag = 'smem constant byte address 0x4 - core index']
  #allocation1 [shape = 'u32[72,128]{1,0:T(1,128)}', space=vmem, size = 0x9000, scoped, tag = 'internal scratch']
  %s0 = inlined_call_operand.hbm [shape: f32[1,256], index: 0, kind: input, shape index: {}]
  %s1 = inlined_call_operand.hbm [shape: bf16[256,512], index: 1, kind: input, shape index: {}]
  %s2 = inlined_call_operand.hbm [shape: f32[1,512], index: 2, kind: input, shape index: {}]
  %s3 = inlined_call_operand.hbm [shape: bf16[512,384], index: 3, kind: input, shape index: {}]
  %s4 = inlined_call_operand.vmem [shape: f32[1,384], index: 4, kind: input, shape index: {}]
  %s5 = inlined_call_operand.hbm [shape: bf16[384,128], index: 5, kind: input, shape index: {}]
  %s6 = inlined_call_operand.vmem [shape: f32[1,128], index: 6, kind: input, shape index: {}]
  %s7 = inlined_call_operand.hbm [shape: f32[1,128], index: 7, kind: output, shape index: {}]
  %s8 = sld [smem:[#allocation0]]
  $region58: #{tpu_custom_call.1} parent=0
    _
  %s10 = ssub.s32 1, %s8
  %s11 = scalar_select 0, %s10, %s8
  $region1: #{tpu_custom_call.1} parent=0
    #allocation2 [shape = 'u8[1024]{0}', space=vmem, size = 0x400, scoped, tag = 'input window, operand 0, single buffered']
    #allocation3 [shape = 's32[1]{0}', space=sflag, size = 0x4, scoped, tag = 'scoped memory for tpu_custom_call.1']
    #allocation4 [shape = 's32[1]{0}', space=sflag, size = 0x4, scoped, tag = 'scoped memory for tpu_custom_call.1']
    #allocation5 [shape = 'u8[262144]{0}', space=vmem, size = 0x40000, scoped, tag = 'input window, operand 1, single buffered']
    #allocation6 [shape = 's32[1]{0}', space=sflag, size = 0x4, scoped, tag = 'scoped memory for tpu_custom_call.1']
    #allocation7 [shape = 'u8[2048]{0}', space=vmem, size = 0x800, scoped, tag = 'input window, operand 2, single buffered']
    #allocation8 [shape = 'u8[393216]{0}', space=vmem, size = 0x60000, scoped, tag = 'input window, operand 3, single buffered']
    #allocation9 [shape = 's32[1]{0}', space=sflag, size = 0x4, scoped, tag = 'scoped memory for tpu_custom_call.1']
    #allocation10 [shape = 'u8[98304]{0}', space=vmem, size = 0x18000, scoped, tag = 'input window, operand 5, single buffered']
    #allocation11 [shape = 'u8[512]{0}', space=vmem, size = 0x400, scoped, tag = 'output window, operand 0, single buffered']
    %12 = vsyncpa [#allocation3], 0
    %13 = vsyncpa [#allocation6], 0
    %14 = vsyncpa [#allocation9], 0
    %15 = vsyncpa [#allocation4], 0
    // Predicated region
    $region2: #{tpu_custom_call.1} parent=1 // pred_check
      _
    $region3: #{tpu_custom_call.1} parent=1 // pred_check_branch
      %17 = sbr.rel (0) target = $region5
    $region4: #{tpu_custom_call.1} parent=1 // pred_region
      %19 = vsyncadd [#allocation3], 0
      %s21 = sshll.u32 %s0, 4
      %s22 = int_to_ptr.hbm [resolvable:$true] %s21
      %s23 = sshll.u32 [#allocation2], 4
      %s24 = int_to_ptr.vmem [resolvable:$true] %s23
      %26 = dma.hbm_to_vmem [thread:$0]  %s22, 32, %s24, [#allocation3]
    $region5: #{tpu_custom_call.1} parent=1 // pred_fallthru
      _
    // Predicated region
    $region6: #{tpu_custom_call.1} parent=1 // pred_check
      _
    $region7: #{tpu_custom_call.1} parent=1 // pred_check_branch
      %28 = sbr.rel (0) target = $region9
    $region8: #{tpu_custom_call.1} parent=1 // pred_region
      %30 = vsyncadd [#allocation6], 0
      %s31 = sshll.u32 %s1, 4
      %s32 = int_to_ptr.hbm [resolvable:$true] %s31
      %s33 = sshll.u32 [#allocation5], 4
      %s34 = int_to_ptr.vmem [resolvable:$true] %s33
      %39 = dma.hbm_to_vmem [thread:$0]  %s32, 8192, %s34, [#allocation6], 256, 256, 16
    $region9: #{tpu_custom_call.1} parent=1 // pred_fallthru
      _
    // Predicated region
    $region10: #{tpu_custom_call.1} parent=1 // pred_check
      _
    $region11: #{tpu_custom_call.1} parent=1 // pred_check_branch
      %41 = sbr.rel (0) target = $region13
    $region12: #{tpu_custom_call.1} parent=1 // pred_region
      %43 = vsyncadd [#allocation6], 0
      %s45 = sshll.u32 %s2, 4
      %s46 = int_to_ptr.hbm [resolvable:$true] %s45
      %s47 = sshll.u32 [#allocation7], 4
      %s48 = int_to_ptr.vmem [resolvable:$true] %s47
      %50 = dma.hbm_to_vmem [thread:$0]  %s46, 64, %s48, [#allocation6]
    $region13: #{tpu_custom_call.1} parent=1 // pred_fallthru
      _
    // Predicated region
    $region14: #{tpu_custom_call.1} parent=1 // pred_check
      _
    $region15: #{tpu_custom_call.1} parent=1 // pred_check_branch
      %52 = sbr.rel (0) target = $region17
    $region16: #{tpu_custom_call.1} parent=1 // pred_region
      %54 = vsyncadd [#allocation9], 0
      %s55 = sshll.u32 %s3, 4
      %s56 = int_to_ptr.hbm [resolvable:$true] %s55
      %s57 = sshll.u32 [#allocation8], 4
      %s58 = int_to_ptr.vmem [resolvable:$true] %s57
      %63 = dma.hbm_to_vmem [thread:$0]  %s56, 12288, %s58, [#allocation9], 192, 192, 12
    $region17: #{tpu_custom_call.1} parent=1 // pred_fallthru
      _
    // Predicated region
    $region18: #{tpu_custom_call.1} parent=1 // pred_check
      _
    $region19: #{tpu_custom_call.1} parent=1 // pred_check_branch
      %65 = sbr.rel (0) target = $region21
    $region20: #{tpu_custom_call.1} parent=1 // pred_region
      _
    $region21: #{tpu_custom_call.1} parent=1 // pred_fallthru
      _
    // Predicated region
    $region22: #{tpu_custom_call.1} parent=1 // pred_check
      _
    $region23: #{tpu_custom_call.1} parent=1 // pred_check_branch
      %67 = sbr.rel (0) target = $region25
    $region24: #{tpu_custom_call.1} parent=1 // pred_region
      %69 = vsyncadd [#allocation9], 0
      %s70 = sshll.u32 %s5, 4
      %s71 = int_to_ptr.hbm [resolvable:$true] %s70
      %s72 = sshll.u32 [#allocation10], 4
      %s73 = int_to_ptr.vmem [resolvable:$true] %s72
      %78 = dma.hbm_to_vmem [thread:$0]  %s71, 3072, %s73, [#allocation9], 64, 64, 4
    $region25: #{tpu_custom_call.1} parent=1 // pred_fallthru
      _
    // Predicated region
    $region26: #{tpu_custom_call.1} parent=1 // pred_check
      _
    $region27: #{tpu_custom_call.1} parent=1 // pred_check_branch
      %80 = sbr.rel (0) target = $region29
    $region28: #{tpu_custom_call.1} parent=1 // pred_region
      _
    $region29: #{tpu_custom_call.1} parent=1 // pred_fallthru
      _
    // Predicated region
    $region30: #{tpu_custom_call.1} parent=1 // pred_check
      _
    $region31: #{tpu_custom_call.1} parent=1 // pred_check_branch
      %82 = sbr.rel (0) target = $region33
    $region32: #{tpu_custom_call.1} parent=1 // pred_region
      %84 = dma.done [#allocation3], 32
    $region33: #{tpu_custom_call.1} parent=1 // pred_fallthru
      _
    // Predicated region
    $region34: #{tpu_custom_call.1} parent=1 // pred_check
      _
    $region35: #{tpu_custom_call.1} parent=1 // pred_check_branch
      %86 = sbr.rel (0) target = $region37
    $region36: #{tpu_custom_call.1} parent=1 // pred_region
      %88 = dma.done [#allocation6], 8192
    $region37: #{tpu_custom_call.1} parent=1 // pred_fallthru
      _
    // Predicated region
    $region38: #{tpu_custom_call.1} parent=1 // pred_check
      _
    $region39: #{tpu_custom_call.1} parent=1 // pred_check_branch
      %90 = sbr.rel (0) target = $region41
    $region40: #{tpu_custom_call.1} parent=1 // pred_region
      %92 = dma.done [#allocation6], 64
    $region41: #{tpu_custom_call.1} parent=1 // pred_fallthru
      _
    // Predicated region
    $region42: #{tpu_custom_call.1} parent=1 // pred_check
      _
    $region43: #{tpu_custom_call.1} parent=1 // pred_check_branch
      %94 = sbr.rel (0) target = $region45
    $region44: #{tpu_custom_call.1} parent=1 // pred_region
      %96 = dma.done [#allocation9], 12288
    $region45: #{tpu_custom_call.1} parent=1 // pred_fallthru
      _
    // Predicated region
    $region46: #{tpu_custom_call.1} parent=1 // pred_check
      _
    $region47: #{tpu_custom_call.1} parent=1 // pred_check_branch
      %98 = sbr.rel (0) target = $region49
    $region48: #{tpu_custom_call.1} parent=1 // pred_region
      %100 = dma.done [#allocation9], 3072
    $region49: #{tpu_custom_call.1} parent=1 // pred_fallthru
      _
    %v101 = vld [vmem:[#allocation2] sm:$0x3]
    %v103 = vperm.slane %v101, 0
    %v104 = vperm.slane %v101, 1
    %v107 = vpack.c.bf16 %v103, %v103
    %v108 = vpack.c.bf16 %v104, %v104
    %v109 = vld [vmem:[#allocation5] sm:$0xff]
    %v110 = vld [vmem:[#allocation5 + $0x8] sm:$0xff]
    %v111 = vld [vmem:[#allocation5 + $0x10] sm:$0xff]
    %v112 = vld [vmem:[#allocation5 + $0x18] sm:$0xff]
    %v113 = vld [vmem:[#allocation5 + $0x20] sm:$0xff]
    %v114 = vld [vmem:[#allocation5 + $0x28] sm:$0xff]
    %v115 = vld [vmem:[#allocation5 + $0x30] sm:$0xff]
    %v116 = vld [vmem:[#allocation5 + $0x38] sm:$0xff]
    %v117 = vld [vmem:[#allocation5 + $0x40] sm:$0xff]
    %v118 = vld [vmem:[#allocation5 + $0x48] sm:$0xff]
    %v119 = vld [vmem:[#allocation5 + $0x50] sm:$0xff]
    %v120 = vld [vmem:[#allocation5 + $0x58] sm:$0xff]
    %v121 = vld [vmem:[#allocation5 + $0x60] sm:$0xff]
    %v122 = vld [vmem:[#allocation5 + $0x68] sm:$0xff]
    %v123 = vld [vmem:[#allocation5 + $0x70] sm:$0xff]
    %v124 = vld [vmem:[#allocation5 + $0x78] sm:$0xff]
    %v125 = vld [vmem:[#allocation5 + $0x80] sm:$0xff]
    %v126 = vld [vmem:[#allocation5 + $0x88] sm:$0xff]
    %v127 = vld [vmem:[#allocation5 + $0x90] sm:$0xff]
    %v128 = vld [vmem:[#allocation5 + $0x98] sm:$0xff]
    %v129 = vld [vmem:[#allocation5 + $0xa0] sm:$0xff]
    %v130 = vld [vmem:[#allocation5 + $0xa8] sm:$0xff]
    %v131 = vld [vmem:[#allocation5 + $0xb0] sm:$0xff]
    %v132 = vld [vmem:[#allocation5 + $0xb8] sm:$0xff]
    %v133 = vld [vmem:[#allocation5 + $0xc0] sm:$0xff]
    %v134 = vld [vmem:[#allocation5 + $0xc8] sm:$0xff]
    %v135 = vld [vmem:[#allocation5 + $0xd0] sm:$0xff]
    %v136 = vld [vmem:[#allocation5 + $0xd8] sm:$0xff]
    %v137 = vld [vmem:[#allocation5 + $0xe0] sm:$0xff]
    %v138 = vld [vmem:[#allocation5 + $0xe8] sm:$0xff]
    %v139 = vld [vmem:[#allocation5 + $0xf0] sm:$0xff]
    %v140 = vld [vmem:[#allocation5 + $0xf8] sm:$0xff]
    %v141 = vld [vmem:[#allocation5 + $0x100] sm:$0xff]
    %v142 = vld [vmem:[#allocation5 + $0x108] sm:$0xff]
    %v143 = vld [vmem:[#allocation5 + $0x110] sm:$0xff]
    %v144 = vld [vmem:[#allocation5 + $0x118] sm:$0xff]
    %v145 = vld [vmem:[#allocation5 + $0x120] sm:$0xff]
    %v146 = vld [vmem:[#allocation5 + $0x128] sm:$0xff]
    %v147 = vld [vmem:[#allocation5 + $0x130] sm:$0xff]
    %v148 = vld [vmem:[#allocation5 + $0x138] sm:$0xff]
    %v149 = vld [vmem:[#allocation5 + $0x140] sm:$0xff]
    %v150 = vld [vmem:[#allocation5 + $0x148] sm:$0xff]
    %v151 = vld [vmem:[#allocation5 + $0x150] sm:$0xff]
    %v152 = vld [vmem:[#allocation5 + $0x158] sm:$0xff]
    %v153 = vld [vmem:[#allocation5 + $0x160] sm:$0xff]
    %v154 = vld [vmem:[#allocation5 + $0x168] sm:$0xff]
    %v155 = vld [vmem:[#allocation5 + $0x170] sm:$0xff]
    %v156 = vld [vmem:[#allocation5 + $0x178] sm:$0xff]
    %v157 = vld [vmem:[#allocation5 + $0x180] sm:$0xff]
    %v158 = vld [vmem:[#allocation5 + $0x188] sm:$0xff]
    %v159 = vld [vmem:[#allocation5 + $0x190] sm:$0xff]
    %v160 = vld [vmem:[#allocation5 + $0x198] sm:$0xff]
    %v161 = vld [vmem:[#allocation5 + $0x1a0] sm:$0xff]
    %v162 = vld [vmem:[#allocation5 + $0x1a8] sm:$0xff]
    %v163 = vld [vmem:[#allocation5 + $0x1b0] sm:$0xff]
    %v164 = vld [vmem:[#allocation5 + $0x1b8] sm:$0xff]
    %v165 = vld [vmem:[#allocation5 + $0x1c0] sm:$0xff]
    %v166 = vld [vmem:[#allocation5 + $0x1c8] sm:$0xff]
    %v167 = vld [vmem:[#allocation5 + $0x1d0] sm:$0xff]
    %v168 = vld [vmem:[#allocation5 + $0x1d8] sm:$0xff]
    %v169 = vld [vmem:[#allocation5 + $0x1e0] sm:$0xff]
    %v170 = vld [vmem:[#allocation5 + $0x1e8] sm:$0xff]
    %v171 = vld [vmem:[#allocation5 + $0x1f0] sm:$0xff]
    %v172 = vld [vmem:[#allocation5 + $0x1f8] sm:$0xff]
    %v173 = vld [vmem:[#allocation7] sm:$0xf]
    %v238 = vunpack.c.l.b16 %v109
    %v239 = vunpack.c.h.b16 %v109
    %v240 = vunpack.c.l.b16 %v110
    %v241 = vunpack.c.h.b16 %v110
    %v242 = vunpack.c.l.b16 %v111
    %v243 = vunpack.c.h.b16 %v111
    %v244 = vunpack.c.l.b16 %v112
    %v245 = vunpack.c.h.b16 %v112
    %v246 = vunpack.c.l.b16 %v113
    %v247 = vunpack.c.h.b16 %v113
    %v248 = vunpack.c.l.b16 %v114
    %v249 = vunpack.c.h.b16 %v114
    %v250 = vunpack.c.l.b16 %v115
    %v251 = vunpack.c.h.b16 %v115
    %v252 = vunpack.c.l.b16 %v116
    %v253 = vunpack.c.h.b16 %v116
    %v254 = vunpack.c.l.b16 %v117
    %v255 = vunpack.c.h.b16 %v117
    %v256 = vunpack.c.l.b16 %v118
    %v257 = vunpack.c.h.b16 %v118
    %v258 = vunpack.c.l.b16 %v119
    %v259 = vunpack.c.h.b16 %v119
    %v260 = vunpack.c.l.b16 %v120
    %v261 = vunpack.c.h.b16 %v120
    %v262 = vunpack.c.l.b16 %v121
    %v263 = vunpack.c.h.b16 %v121
    %v264 = vunpack.c.l.b16 %v122
    %v265 = vunpack.c.h.b16 %v122
    %v266 = vunpack.c.l.b16 %v123
    %v267 = vunpack.c.h.b16 %v123
    %v268 = vunpack.c.l.b16 %v124
    %v269 = vunpack.c.h.b16 %v124
    %v270 = vunpack.c.l.b16 %v125
    %v271 = vunpack.c.h.b16 %v125
    %v272 = vunpack.c.l.b16 %v126
    %v273 = vunpack.c.h.b16 %v126
    %v274 = vunpack.c.l.b16 %v127
    %v275 = vunpack.c.h.b16 %v127
    %v276 = vunpack.c.l.b16 %v128
    %v277 = vunpack.c.h.b16 %v128
    %v278 = vunpack.c.l.b16 %v129
    %v279 = vunpack.c.h.b16 %v129
    %v280 = vunpack.c.l.b16 %v130
    %v281 = vunpack.c.h.b16 %v130
    %v282 = vunpack.c.l.b16 %v131
    %v283 = vunpack.c.h.b16 %v131
    %v284 = vunpack.c.l.b16 %v132
    %v285 = vunpack.c.h.b16 %v132
    %v286 = vunpack.c.l.b16 %v133
    %v287 = vunpack.c.h.b16 %v133
    %v288 = vunpack.c.l.b16 %v134
    %v289 = vunpack.c.h.b16 %v134
    %v290 = vunpack.c.l.b16 %v135
    %v291 = vunpack.c.h.b16 %v135
    %v292 = vunpack.c.l.b16 %v136
    %v293 = vunpack.c.h.b16 %v136
    %v294 = vunpack.c.l.b16 %v137
    %v295 = vunpack.c.h.b16 %v137
    %v296 = vunpack.c.l.b16 %v138
    %v297 = vunpack.c.h.b16 %v138
    %v298 = vunpack.c.l.b16 %v139
    %v299 = vunpack.c.h.b16 %v139
    %v300 = vunpack.c.l.b16 %v140
    %v301 = vunpack.c.h.b16 %v140
    %v302 = vunpack.c.l.b16 %v141
    %v303 = vunpack.c.h.b16 %v141
    %v304 = vunpack.c.l.b16 %v142
    %v305 = vunpack.c.h.b16 %v142
    %v306 = vunpack.c.l.b16 %v143
    %v307 = vunpack.c.h.b16 %v143
    %v308 = vunpack.c.l.b16 %v144
    %v309 = vunpack.c.h.b16 %v144
    %v310 = vunpack.c.l.b16 %v145
    %v311 = vunpack.c.h.b16 %v145
    %v312 = vunpack.c.l.b16 %v146
    %v313 = vunpack.c.h.b16 %v146
    %v314 = vunpack.c.l.b16 %v147
    %v315 = vunpack.c.h.b16 %v147
    %v316 = vunpack.c.l.b16 %v148
    %v317 = vunpack.c.h.b16 %v148
    %v318 = vunpack.c.l.b16 %v149
    %v319 = vunpack.c.h.b16 %v149
    %v320 = vunpack.c.l.b16 %v150
    %v321 = vunpack.c.h.b16 %v150
    %v322 = vunpack.c.l.b16 %v151
    %v323 = vunpack.c.h.b16 %v151
    %v324 = vunpack.c.l.b16 %v152
    %v325 = vunpack.c.h.b16 %v152
    %v326 = vunpack.c.l.b16 %v153
    %v327 = vunpack.c.h.b16 %v153
    %v328 = vunpack.c.l.b16 %v154
    %v329 = vunpack.c.h.b16 %v154
    %v330 = vunpack.c.l.b16 %v155
    %v331 = vunpack.c.h.b16 %v155
    %v332 = vunpack.c.l.b16 %v156
    %v333 = vunpack.c.h.b16 %v156
    %v334 = vunpack.c.l.b16 %v157
    %v335 = vunpack.c.h.b16 %v157
    %v336 = vunpack.c.l.b16 %v158
    %v337 = vunpack.c.h.b16 %v158
    %v338 = vunpack.c.l.b16 %v159
    %v339 = vunpack.c.h.b16 %v159
    %v340 = vunpack.c.l.b16 %v160
    %v341 = vunpack.c.h.b16 %v160
    %v342 = vunpack.c.l.b16 %v161
    %v343 = vunpack.c.h.b16 %v161
    %v344 = vunpack.c.l.b16 %v162
    %v345 = vunpack.c.h.b16 %v162
    %v346 = vunpack.c.l.b16 %v163
    %v347 = vunpack.c.h.b16 %v163
    %v348 = vunpack.c.l.b16 %v164
    %v349 = vunpack.c.h.b16 %v164
    %v350 = vunpack.c.l.b16 %v165
    %v351 = vunpack.c.h.b16 %v165
    %v352 = vunpack.c.l.b16 %v166
    %v353 = vunpack.c.h.b16 %v166
    %v354 = vunpack.c.l.b16 %v167
    %v355 = vunpack.c.h.b16 %v167
    %v356 = vunpack.c.l.b16 %v168
    %v357 = vunpack.c.h.b16 %v168
    %v358 = vunpack.c.l.b16 %v169
    %v359 = vunpack.c.h.b16 %v169
    %v360 = vunpack.c.l.b16 %v170
    %v361 = vunpack.c.h.b16 %v170
    %v362 = vunpack.c.l.b16 %v171
    %v363 = vunpack.c.h.b16 %v171
    %v364 = vunpack.c.l.b16 %v172
    %v365 = vunpack.c.h.b16 %v172
    %v366 = vpack.c.b16 %v242, %v238
    %v367 = vpack.c.b16 %v243, %v239
    %v368 = vpack.c.b16 %v244, %v240
    %v369 = vpack.c.b16 %v245, %v241
    %v370 = vpack.c.b16 %v250, %v246
    %v371 = vpack.c.b16 %v251, %v247
    %v372 = vpack.c.b16 %v252, %v248
    %v373 = vpack.c.b16 %v253, %v249
    %v374 = vpack.c.b16 %v258, %v254
    %v375 = vpack.c.b16 %v259, %v255
    %v376 = vpack.c.b16 %v260, %v256
    %v377 = vpack.c.b16 %v261, %v257
    %v378 = vpack.c.b16 %v266, %v262
    %v379 = vpack.c.b16 %v267, %v263
    %v380 = vpack.c.b16 %v268, %v264
    %v381 = vpack.c.b16 %v269, %v265
    %v382 = vpack.c.b16 %v274, %v270
    %v383 = vpack.c.b16 %v275, %v271
    %v384 = vpack.c.b16 %v276, %v272
    %v385 = vpack.c.b16 %v277, %v273
    %v386 = vpack.c.b16 %v282, %v278
    %v387 = vpack.c.b16 %v283, %v279
    %v388 = vpack.c.b16 %v284, %v280
    %v389 = vpack.c.b16 %v285, %v281
    %v390 = vpack.c.b16 %v290, %v286
    %v391 = vpack.c.b16 %v291, %v287
    %v392 = vpack.c.b16 %v292, %v288
    %v393 = vpack.c.b16 %v293, %v289
    %v394 = vpack.c.b16 %v298, %v294
    %v395 = vpack.c.b16 %v299, %v295
    %v396 = vpack.c.b16 %v300, %v296
    %v397 = vpack.c.b16 %v301, %v297
    %v398 = vpack.c.b16 %v306, %v302
    %v399 = vpack.c.b16 %v307, %v303
    %v400 = vpack.c.b16 %v308, %v304
    %v401 = vpack.c.b16 %v309, %v305
    %v402 = vpack.c.b16 %v314, %v310
    %v403 = vpack.c.b16 %v315, %v311
    %v404 = vpack.c.b16 %v316, %v312
    %v405 = vpack.c.b16 %v317, %v313
    %v406 = vpack.c.b16 %v322, %v318
    %v407 = vpack.c.b16 %v323, %v319
    %v408 = vpack.c.b16 %v324, %v320
    %v409 = vpack.c.b16 %v325, %v321
    %v410 = vpack.c.b16 %v330, %v326
    %v411 = vpack.c.b16 %v331, %v327
    %v412 = vpack.c.b16 %v332, %v328
    %v413 = vpack.c.b16 %v333, %v329
    %v414 = vpack.c.b16 %v338, %v334
    %v415 = vpack.c.b16 %v339, %v335
    %v416 = vpack.c.b16 %v340, %v336
    %v417 = vpack.c.b16 %v341, %v337
    %v418 = vpack.c.b16 %v346, %v342
    %v419 = vpack.c.b16 %v347, %v343
    %v420 = vpack.c.b16 %v348, %v344
    %v421 = vpack.c.b16 %v349, %v345
    %v422 = vpack.c.b16 %v354, %v350
    %v423 = vpack.c.b16 %v355, %v351
    %v424 = vpack.c.b16 %v356, %v352
    %v425 = vpack.c.b16 %v357, %v353
    %v426 = vpack.c.b16 %v362, %v358
    %v427 = vpack.c.b16 %v363, %v359
    %v428 = vpack.c.b16 %v364, %v360
    %v429 = vpack.c.b16 %v365, %v361
    %v495 = vperm.slane %v173, 0
    %v496 = vperm.slane %v173, 1
    %v497 = vperm.slane %v173, 2
    %v498 = vperm.slane %v173, 3
    %503 = vmatpush.bf16.msra.mxu0 %v394
    %504 = vmatpush.bf16.msra.mxu0 %v390
    %505 = vmatpush.bf16.msra.mxu0 %v386
    %506 = vmatpush.bf16.msra.mxu0 %v382
    %507 = vmatpush.bf16.msra.mxu0 %v378
    %508 = vmatpush.bf16.msra.mxu0 %v374
    %509 = vmatpush.bf16.msra.mxu0 %v370
    %510 = vmatpush.bf16.msra.mxu0 %v366
    %511 = vmatmul.bf16.gmra.mxu0 %v107
    %v512 = vpop.f32.mrf.mxu0
    %v513 = vadd.f32 %v495, %v512
    %v514 = vpop.f32.mrf.mxu0
    %515 = vdwg.mxu0
    %516 = vmatpush.bf16.msra.mxu0 %v426
    %517 = vmatpush.bf16.msra.mxu0 %v422
    %518 = vmatpush.bf16.msra.mxu0 %v418
    %519 = vmatpush.bf16.msra.mxu0 %v414
    %520 = vmatpush.bf16.msra.mxu0 %v410
    %521 = vmatpush.bf16.msra.mxu0 %v406
    %522 = vmatpush.bf16.msra.mxu0 %v402
    %523 = vmatpush.bf16.msra.mxu0 %v398
    %524 = vmatmul.bf16.gmra.mxu0 %v108
    %v525 = vpop.f32.mrf.mxu0
    %v526 = vadd.f32 %v513, %v525
    %v527 = vpop.f32.mrf.mxu0
    %528 = vdwg.mxu0
    %529 = vmatpush.bf16.msra.mxu0 %v395
    %530 = vmatpush.bf16.msra.mxu0 %v391
    %531 = vmatpush.bf16.msra.mxu0 %v387
    %532 = vmatpush.bf16.msra.mxu0 %v383
    %533 = vmatpush.bf16.msra.mxu0 %v379
    %534 = vmatpush.bf16.msra.mxu0 %v375
    %535 = vmatpush.bf16.msra.mxu0 %v371
    %536 = vmatpush.bf16.msra.mxu0 %v367
    %537 = vmatmul.bf16.gmra.mxu0 %v107
    %v538 = vpop.f32.mrf.mxu0
    %v539 = vadd.f32 %v496, %v538
    %v540 = vpop.f32.mrf.mxu0
    %541 = vdwg.mxu0
    %542 = vmatpush.bf16.msra.mxu0 %v427
    %543 = vmatpush.bf16.msra.mxu0 %v423
    %544 = vmatpush.bf16.msra.mxu0 %v419
    %545 = vmatpush.bf16.msra.mxu0 %v415
    %546 = vmatpush.bf16.msra.mxu0 %v411
    %547 = vmatpush.bf16.msra.mxu0 %v407
    %548 = vmatpush.bf16.msra.mxu0 %v403
    %549 = vmatpush.bf16.msra.mxu0 %v399
    %550 = vmatmul.bf16.gmra.mxu0 %v108
    %v551 = vpop.f32.mrf.mxu0
    %v552 = vadd.f32 %v539, %v551
    %v553 = vpop.f32.mrf.mxu0
    %554 = vdwg.mxu0
    %555 = vmatpush.bf16.msra.mxu0 %v396
    %556 = vmatpush.bf16.msra.mxu0 %v392
    %557 = vmatpush.bf16.msra.mxu0 %v388
    %558 = vmatpush.bf16.msra.mxu0 %v384
    %559 = vmatpush.bf16.msra.mxu0 %v380
    %560 = vmatpush.bf16.msra.mxu0 %v376
    %561 = vmatpush.bf16.msra.mxu0 %v372
    %562 = vmatpush.bf16.msra.mxu0 %v368
    %563 = vmatmul.bf16.gmra.mxu0 %v107
    %v564 = vpop.f32.mrf.mxu0
    %v565 = vadd.f32 %v497, %v564
    %v566 = vpop.f32.mrf.mxu0
    %567 = vdwg.mxu0
    %568 = vmatpush.bf16.msra.mxu0 %v428
    %569 = vmatpush.bf16.msra.mxu0 %v424
    %570 = vmatpush.bf16.msra.mxu0 %v420
    %571 = vmatpush.bf16.msra.mxu0 %v416
    %572 = vmatpush.bf16.msra.mxu0 %v412
    %573 = vmatpush.bf16.msra.mxu0 %v408
    %574 = vmatpush.bf16.msra.mxu0 %v404
    %575 = vmatpush.bf16.msra.mxu0 %v400
    %576 = vmatmul.bf16.gmra.mxu0 %v108
    %v577 = vpop.f32.mrf.mxu0
    %v578 = vadd.f32 %v565, %v577
    %v579 = vpop.f32.mrf.mxu0
    %580 = vdwg.mxu0
    %581 = vmatpush.bf16.msra.mxu0 %v397
    %582 = vmatpush.bf16.msra.mxu0 %v393
    %583 = vmatpush.bf16.msra.mxu0 %v389
    %584 = vmatpush.bf16.msra.mxu0 %v385
    %585 = vmatpush.bf16.msra.mxu0 %v381
    %586 = vmatpush.bf16.msra.mxu0 %v377
    %587 = vmatpush.bf16.msra.mxu0 %v373
    %588 = vmatpush.bf16.msra.mxu0 %v369
    %589 = vmatmul.bf16.gmra.mxu0 %v107
    %v590 = vpop.f32.mrf.mxu0
    %v591 = vadd.f32 %v498, %v590
    %v592 = vpop.f32.mrf.mxu0
    %593 = vdwg.mxu0
    %594 = vmatpush.bf16.msra.mxu0 %v429
    %595 = vmatpush.bf16.msra.mxu0 %v425
    %596 = vmatpush.bf16.msra.mxu0 %v421
    %597 = vmatpush.bf16.msra.mxu0 %v417
    %598 = vmatpush.bf16.msra.mxu0 %v413
    %599 = vmatpush.bf16.msra.mxu0 %v409
    %600 = vmatpush.bf16.msra.mxu0 %v405
    %601 = vmatpush.bf16.msra.mxu0 %v401
    %602 = vmatmul.bf16.gmra.mxu0 %v108
    %v603 = vpop.f32.mrf.mxu0
    %v604 = vadd.f32 %v591, %v603
    %v605 = vpop.f32.mrf.mxu0
    %606 = vdwg.mxu0
    %v607 = vmax.f32 %v526, 0.0
    %v608 = vmax.f32 %v552, 0.0
    %v609 = vmax.f32 %v578, 0.0
    %v610 = vmax.f32 %v604, 0.0
    %v611 = vpack.c.bf16 %v607, %v607
    %v612 = vpack.c.bf16 %v608, %v608
    %v613 = vpack.c.bf16 %v609, %v609
    %v614 = vpack.c.bf16 %v610, %v610
    %v615 = vld [vmem:[#allocation8] sm:$0xff]
    %v616 = vld [vmem:[#allocation8 + $0x8] sm:$0xf]
    %v617 = vld [vmem:[#allocation8 + $0xc] sm:$0xff]
    %v618 = vld [vmem:[#allocation8 + $0x14] sm:$0xf]
    %v619 = vld [vmem:[#allocation8 + $0x18] sm:$0xff]
    %v620 = vld [vmem:[#allocation8 + $0x20] sm:$0xf]
    %v621 = vld [vmem:[#allocation8 + $0x24] sm:$0xff]
    %v622 = vld [vmem:[#allocation8 + $0x2c] sm:$0xf]
    %v623 = vld [vmem:[#allocation8 + $0x30] sm:$0xff]
    %v624 = vld [vmem:[#allocation8 + $0x38] sm:$0xf]
    %v625 = vld [vmem:[#allocation8 + $0x3c] sm:$0xff]
    %v626 = vld [vmem:[#allocation8 + $0x44] sm:$0xf]
    %v627 = vld [vmem:[#allocation8 + $0x48] sm:$0xff]
    %v628 = vld [vmem:[#allocation8 + $0x50] sm:$0xf]
    %v629 = vld [vmem:[#allocation8 + $0x54] sm:$0xff]
    %v630 = vld [vmem:[#allocation8 + $0x5c] sm:$0xf]
    %v631 = vld [vmem:[#allocation8 + $0x60] sm:$0xff]
    %v632 = vld [vmem:[#allocation8 + $0x68] sm:$0xf]
    %v633 = vld [vmem:[#allocation8 + $0x6c] sm:$0xff]
    %v634 = vld [vmem:[#allocation8 + $0x74] sm:$0xf]
    %v635 = vld [vmem:[#allocation8 + $0x78] sm:$0xff]
    %v636 = vld [vmem:[#allocation8 + $0x80] sm:$0xf]
    %v637 = vld [vmem:[#allocation8 + $0x84] sm:$0xff]
    %v638 = vld [vmem:[#allocation8 + $0x8c] sm:$0xf]
    %v639 = vld [vmem:[#allocation8 + $0x90] sm:$0xff]
    %v640 = vld [vmem:[#allocation8 + $0x98] sm:$0xf]
    %v641 = vld [vmem:[#allocation8 + $0x9c] sm:$0xff]
    %v642 = vld [vmem:[#allocation8 + $0xa4] sm:$0xf]
    %v643 = vld [vmem:[#allocation8 + $0xa8] sm:$0xff]
    %v644 = vld [vmem:[#allocation8 + $0xb0] sm:$0xf]
    %v645 = vld [vmem:[#allocation8 + $0xb4] sm:$0xff]
    %v646 = vld [vmem:[#allocation8 + $0xbc] sm:$0xf]
    %v647 = vld [vmem:[#allocation8 + $0xc0] sm:$0xff]
    %v648 = vld [vmem:[#allocation8 + $0xc8] sm:$0xf]
    %v649 = vld [vmem:[#allocation8 + $0xcc] sm:$0xff]
    %v650 = vld [vmem:[#allocation8 + $0xd4] sm:$0xf]
    %v651 = vld [vmem:[#allocation8 + $0xd8] sm:$0xff]
    %v652 = vld [vmem:[#allocation8 + $0xe0] sm:$0xf]
    %v653 = vld [vmem:[#allocation8 + $0xe4] sm:$0xff]
    %v654 = vld [vmem:[#allocation8 + $0xec] sm:$0xf]
    %v655 = vld [vmem:[#allocation8 + $0xf0] sm:$0xff]
    %v656 = vld [vmem:[#allocation8 + $0xf8] sm:$0xf]
    %v657 = vld [vmem:[#allocation8 + $0xfc] sm:$0xff]
    %v658 = vld [vmem:[#allocation8 + $0x104] sm:$0xf]
    %v659 = vld [vmem:[#allocation8 + $0x108] sm:$0xff]
    %v660 = vld [vmem:[#allocation8 + $0x110] sm:$0xf]
    %v661 = vld [vmem:[#allocation8 + $0x114] sm:$0xff]
    %v662 = vld [vmem:[#allocation8 + $0x11c] sm:$0xf]
    %v663 = vld [vmem:[#allocation8 + $0x120] sm:$0xff]
    %v664 = vld [vmem:[#allocation8 + $0x128] sm:$0xf]
    %v665 = vld [vmem:[#allocation8 + $0x12c] sm:$0xff]
    %v666 = vld [vmem:[#allocation8 + $0x134] sm:$0xf]
    %v667 = vld [vmem:[#allocation8 + $0x138] sm:$0xff]
    %v668 = vld [vmem:[#allocation8 + $0x140] sm:$0xf]
    %v669 = vld [vmem:[#allocation8 + $0x144] sm:$0xff]
    %v670 = vld [vmem:[#allocation8 + $0x14c] sm:$0xf]
    %v671 = vld [vmem:[#allocation8 + $0x150] sm:$0xff]
    %v672 = vld [vmem:[#allocation8 + $0x158] sm:$0xf]
    %v673 = vld [vmem:[#allocation8 + $0x15c] sm:$0xff]
    %v674 = vld [vmem:[#allocation8 + $0x164] sm:$0xf]
    %v675 = vld [vmem:[#allocation8 + $0x168] sm:$0xff]
    %v676 = vld [vmem:[#allocation8 + $0x170] sm:$0xf]
    %v677 = vld [vmem:[#allocation8 + $0x174] sm:$0xff]
    %v678 = vld [vmem:[#allocation8 + $0x17c] sm:$0xf]
    %v679 = vld [vmem:[#allocation8 + $0x180] sm:$0xff]
    %v680 = vld [vmem:[#allocation8 + $0x188] sm:$0xf]
    %v681 = vld [vmem:[#allocation8 + $0x18c] sm:$0xff]
    %v682 = vld [vmem:[#allocation8 + $0x194] sm:$0xf]
    %v683 = vld [vmem:[#allocation8 + $0x198] sm:$0xff]
    %v684 = vld [vmem:[#allocation8 + $0x1a0] sm:$0xf]
    %v685 = vld [vmem:[#allocation8 + $0x1a4] sm:$0xff]
    %v686 = vld [vmem:[#allocation8 + $0x1ac] sm:$0xf]
    %v687 = vld [vmem:[#allocation8 + $0x1b0] sm:$0xff]
    %v688 = vld [vmem:[#allocation8 + $0x1b8] sm:$0xf]
    %v689 = vld [vmem:[#allocation8 + $0x1bc] sm:$0xff]
    %v690 = vld [vmem:[#allocation8 + $0x1c4] sm:$0xf]
    %v691 = vld [vmem:[#allocation8 + $0x1c8] sm:$0xff]
    %v692 = vld [vmem:[#allocation8 + $0x1d0] sm:$0xf]
    %v693 = vld [vmem:[#allocation8 + $0x1d4] sm:$0xff]
    %v694 = vld [vmem:[#allocation8 + $0x1dc] sm:$0xf]
    %v695 = vld [vmem:[#allocation8 + $0x1e0] sm:$0xff]
    %v696 = vld [vmem:[#allocation8 + $0x1e8] sm:$0xf]
    %v697 = vld [vmem:[#allocation8 + $0x1ec] sm:$0xff]
    %v698 = vld [vmem:[#allocation8 + $0x1f4] sm:$0xf]
    %v699 = vld [vmem:[#allocation8 + $0x1f8] sm:$0xff]
    %v700 = vld [vmem:[#allocation8 + $0x200] sm:$0xf]
    %v701 = vld [vmem:[#allocation8 + $0x204] sm:$0xff]
    %v702 = vld [vmem:[#allocation8 + $0x20c] sm:$0xf]
    %v703 = vld [vmem:[#allocation8 + $0x210] sm:$0xff]
    %v704 = vld [vmem:[#allocation8 + $0x218] sm:$0xf]
    %v705 = vld [vmem:[#allocation8 + $0x21c] sm:$0xff]
    %v706 = vld [vmem:[#allocation8 + $0x224] sm:$0xf]
    %v707 = vld [vmem:[#allocation8 + $0x228] sm:$0xff]
    %v708 = vld [vmem:[#allocation8 + $0x230] sm:$0xf]
    %v709 = vld [vmem:[#allocation8 + $0x234] sm:$0xff]
    %v710 = vld [vmem:[#allocation8 + $0x23c] sm:$0xf]
    %v711 = vld [vmem:[#allocation8 + $0x240] sm:$0xff]
    %v712 = vld [vmem:[#allocation8 + $0x248] sm:$0xf]
    %v713 = vld [vmem:[#allocation8 + $0x24c] sm:$0xff]
    %v714 = vld [vmem:[#allocation8 + $0x254] sm:$0xf]
    %v715 = vld [vmem:[#allocation8 + $0x258] sm:$0xff]
    %v716 = vld [vmem:[#allocation8 + $0x260] sm:$0xf]
    %v717 = vld [vmem:[#allocation8 + $0x264] sm:$0xff]
    %v718 = vld [vmem:[#allocation8 + $0x26c] sm:$0xf]
    %v719 = vld [vmem:[#allocation8 + $0x270] sm:$0xff]
    %v720 = vld [vmem:[#allocation8 + $0x278] sm:$0xf]
    %v721 = vld [vmem:[#allocation8 + $0x27c] sm:$0xff]
    %v722 = vld [vmem:[#allocation8 + $0x284] sm:$0xf]
    %v723 = vld [vmem:[#allocation8 + $0x288] sm:$0xff]
    %v724 = vld [vmem:[#allocation8 + $0x290] sm:$0xf]
    %v725 = vld [vmem:[#allocation8 + $0x294] sm:$0xff]
    %v726 = vld [vmem:[#allocation8 + $0x29c] sm:$0xf]
    %v727 = vld [vmem:[#allocation8 + $0x2a0] sm:$0xff]
    %v728 = vld [vmem:[#allocation8 + $0x2a8] sm:$0xf]
    %v729 = vld [vmem:[#allocation8 + $0x2ac] sm:$0xff]
    %v730 = vld [vmem:[#allocation8 + $0x2b4] sm:$0xf]
    %v731 = vld [vmem:[#allocation8 + $0x2b8] sm:$0xff]
    %v732 = vld [vmem:[#allocation8 + $0x2c0] sm:$0xf]
    %v733 = vld [vmem:[#allocation8 + $0x2c4] sm:$0xff]
    %v734 = vld [vmem:[#allocation8 + $0x2cc] sm:$0xf]
    %v735 = vld [vmem:[#allocation8 + $0x2d0] sm:$0xff]
    %v736 = vld [vmem:[#allocation8 + $0x2d8] sm:$0xf]
    %v737 = vld [vmem:[#allocation8 + $0x2dc] sm:$0xff]
    %v738 = vld [vmem:[#allocation8 + $0x2e4] sm:$0xf]
    %v739 = vld [vmem:[#allocation8 + $0x2e8] sm:$0xff]
    %v740 = vld [vmem:[#allocation8 + $0x2f0] sm:$0xf]
    %v741 = vld [vmem:[#allocation8 + $0x2f4] sm:$0xff]
    %v742 = vld [vmem:[#allocation8 + $0x2fc] sm:$0xf]
    %v743 = vld [vmem:[%s4] sm:$0x7]
    %v872 = vunpack.c.l.b16 %v615
    %v873 = vunpack.c.h.b16 %v615
    %v874 = vunpack.c.l.b16 %v616
    %v875 = vunpack.c.l.b16 %v617
    %v876 = vunpack.c.h.b16 %v617
    %v877 = vunpack.c.l.b16 %v618
    %v878 = vunpack.c.l.b16 %v619
    %v879 = vunpack.c.h.b16 %v619
    %v880 = vunpack.c.l.b16 %v620
    %v881 = vunpack.c.l.b16 %v621
    %v882 = vunpack.c.h.b16 %v621
    %v883 = vunpack.c.l.b16 %v622
    %v884 = vunpack.c.l.b16 %v623
    %v885 = vunpack.c.h.b16 %v623
    %v886 = vunpack.c.l.b16 %v624
    %v887 = vunpack.c.l.b16 %v625
    %v888 = vunpack.c.h.b16 %v625
    %v889 = vunpack.c.l.b16 %v626
    %v890 = vunpack.c.l.b16 %v627
    %v891 = vunpack.c.h.b16 %v627
    %v892 = vunpack.c.l.b16 %v628
    %v893 = vunpack.c.l.b16 %v629
    %v894 = vunpack.c.h.b16 %v629
    %v895 = vunpack.c.l.b16 %v630
    %v896 = vunpack.c.l.b16 %v631
    %v897 = vunpack.c.h.b16 %v631
    %v898 = vunpack.c.l.b16 %v632
    %v899 = vunpack.c.l.b16 %v633
    %v900 = vunpack.c.h.b16 %v633
    %v901 = vunpack.c.l.b16 %v634
    %v902 = vunpack.c.l.b16 %v635
    %v903 = vunpack.c.h.b16 %v635
    %v904 = vunpack.c.l.b16 %v636
    %v905 = vunpack.c.l.b16 %v637
    %v906 = vunpack.c.h.b16 %v637
    %v907 = vunpack.c.l.b16 %v638
    %v908 = vunpack.c.l.b16 %v639
    %v909 = vunpack.c.h.b16 %v639
    %v910 = vunpack.c.l.b16 %v640
    %v911 = vunpack.c.l.b16 %v641
    %v912 = vunpack.c.h.b16 %v641
    %v913 = vunpack.c.l.b16 %v642
    %v914 = vunpack.c.l.b16 %v643
    %v915 = vunpack.c.h.b16 %v643
    %v916 = vunpack.c.l.b16 %v644
    %v917 = vunpack.c.l.b16 %v645
    %v918 = vunpack.c.h.b16 %v645
    %v919 = vunpack.c.l.b16 %v646
    %v920 = vunpack.c.l.b16 %v647
    %v921 = vunpack.c.h.b16 %v647
    %v922 = vunpack.c.l.b16 %v648
    %v923 = vunpack.c.l.b16 %v649
    %v924 = vunpack.c.h.b16 %v649
    %v925 = vunpack.c.l.b16 %v650
    %v926 = vunpack.c.l.b16 %v651
    %v927 = vunpack.c.h.b16 %v651
    %v928 = vunpack.c.l.b16 %v652
    %v929 = vunpack.c.l.b16 %v653
    %v930 = vunpack.c.h.b16 %v653
    %v931 = vunpack.c.l.b16 %v654
    %v932 = vunpack.c.l.b16 %v655
    %v933 = vunpack.c.h.b16 %v655
    %v934 = vunpack.c.l.b16 %v656
    %v935 = vunpack.c.l.b16 %v657
    %v936 = vunpack.c.h.b16 %v657
    %v937 = vunpack.c.l.b16 %v658
    %v938 = vunpack.c.l.b16 %v659
    %v939 = vunpack.c.h.b16 %v659
    %v940 = vunpack.c.l.b16 %v660
    %v941 = vunpack.c.l.b16 %v661
    %v942 = vunpack.c.h.b16 %v661
    %v943 = vunpack.c.l.b16 %v662
    %v944 = vunpack.c.l.b16 %v663
    %v945 = vunpack.c.h.b16 %v663
    %v946 = vunpack.c.l.b16 %v664
    %v947 = vunpack.c.l.b16 %v665
    %v948 = vunpack.c.h.b16 %v665
    %v949 = vunpack.c.l.b16 %v666
    %v950 = vunpack.c.l.b16 %v667
    %v951 = vunpack.c.h.b16 %v667
    %v952 = vunpack.c.l.b16 %v668
    %v953 = vunpack.c.l.b16 %v669
    %v954 = vunpack.c.h.b16 %v669
    %v955 = vunpack.c.l.b16 %v670
    %v956 = vunpack.c.l.b16 %v671
    %v957 = vunpack.c.h.b16 %v671
    %v958 = vunpack.c.l.b16 %v672
    %v959 = vunpack.c.l.b16 %v673
    %v960 = vunpack.c.h.b16 %v673
    %v961 = vunpack.c.l.b16 %v674
    %v962 = vunpack.c.l.b16 %v675
    %v963 = vunpack.c.h.b16 %v675
    %v964 = vunpack.c.l.b16 %v676
    %v965 = vunpack.c.l.b16 %v677
    %v966 = vunpack.c.h.b16 %v677
    %v967 = vunpack.c.l.b16 %v678
    %v968 = vunpack.c.l.b16 %v679
    %v969 = vunpack.c.h.b16 %v679
    %v970 = vunpack.c.l.b16 %v680
    %v971 = vunpack.c.l.b16 %v681
    %v972 = vunpack.c.h.b16 %v681
    %v973 = vunpack.c.l.b16 %v682
    %v974 = vunpack.c.l.b16 %v683
    %v975 = vunpack.c.h.b16 %v683
    %v976 = vunpack.c.l.b16 %v684
    %v977 = vunpack.c.l.b16 %v685
    %v978 = vunpack.c.h.b16 %v685
    %v979 = vunpack.c.l.b16 %v686
    %v980 = vunpack.c.l.b16 %v687
    %v981 = vunpack.c.h.b16 %v687
    %v982 = vunpack.c.l.b16 %v688
    %v983 = vunpack.c.l.b16 %v689
    %v984 = vunpack.c.h.b16 %v689
    %v985 = vunpack.c.l.b16 %v690
    %v986 = vunpack.c.l.b16 %v691
    %v987 = vunpack.c.h.b16 %v691
    %v988 = vunpack.c.l.b16 %v692
    %v989 = vunpack.c.l.b16 %v693
    %v990 = vunpack.c.h.b16 %v693
    %v991 = vunpack.c.l.b16 %v694
    %v992 = vunpack.c.l.b16 %v695
    %v993 = vunpack.c.h.b16 %v695
    %v994 = vunpack.c.l.b16 %v696
    %v995 = vunpack.c.l.b16 %v697
    %v996 = vunpack.c.h.b16 %v697
    %v997 = vunpack.c.l.b16 %v698
    %v998 = vunpack.c.l.b16 %v699
    %v999 = vunpack.c.h.b16 %v699
    %v1000 = vunpack.c.l.b16 %v700
    %v1001 = vunpack.c.l.b16 %v701
    %v1002 = vunpack.c.h.b16 %v701
    %v1003 = vunpack.c.l.b16 %v702
    %v1004 = vunpack.c.l.b16 %v703
    %v1005 = vunpack.c.h.b16 %v703
    %v1006 = vunpack.c.l.b16 %v704
    %v1007 = vunpack.c.l.b16 %v705
    %v1008 = vunpack.c.h.b16 %v705
    %v1009 = vunpack.c.l.b16 %v706
    %v1010 = vunpack.c.l.b16 %v707
    %v1011 = vunpack.c.h.b16 %v707
    %v1012 = vunpack.c.l.b16 %v708
    %v1013 = vunpack.c.l.b16 %v709
    %v1014 = vunpack.c.h.b16 %v709
    %v1015 = vunpack.c.l.b16 %v710
    %v1016 = vunpack.c.l.b16 %v711
    %v1017 = vunpack.c.h.b16 %v711
    %v1018 = vunpack.c.l.b16 %v712
    %v1019 = vunpack.c.l.b16 %v713
    %v1020 = vunpack.c.h.b16 %v713
    %v1021 = vunpack.c.l.b16 %v714
    %v1022 = vunpack.c.l.b16 %v715
    %v1023 = vunpack.c.h.b16 %v715
    %v1024 = vunpack.c.l.b16 %v716
    %v1025 = vunpack.c.l.b16 %v717
    %v1026 = vunpack.c.h.b16 %v717
    %v1027 = vunpack.c.l.b16 %v718
    %v1028 = vunpack.c.l.b16 %v719
    %v1029 = vunpack.c.h.b16 %v719
    %v1030 = vunpack.c.l.b16 %v720
    %v1031 = vunpack.c.l.b16 %v721
    %v1032 = vunpack.c.h.b16 %v721
    %v1033 = vunpack.c.l.b16 %v722
    %v1034 = vunpack.c.l.b16 %v723
    %v1035 = vunpack.c.h.b16 %v723
    %v1036 = vunpack.c.l.b16 %v724
    %v1037 = vunpack.c.l.b16 %v725
    %v1038 = vunpack.c.h.b16 %v725
    %v1039 = vunpack.c.l.b16 %v726
    %v1040 = vunpack.c.l.b16 %v727
    %v1041 = vunpack.c.h.b16 %v727
    %v1042 = vunpack.c.l.b16 %v728
    %v1043 = vunpack.c.l.b16 %v729
    %v1044 = vunpack.c.h.b16 %v729
    %v1045 = vunpack.c.l.b16 %v730
    %v1046 = vunpack.c.l.b16 %v731
    %v1047 = vunpack.c.h.b16 %v731
    %v1048 = vunpack.c.l.b16 %v732
    %v1049 = vunpack.c.l.b16 %v733
    %v1050 = vunpack.c.h.b16 %v733
    %v1051 = vunpack.c.l.b16 %v734
    %v1052 = vunpack.c.l.b16 %v735
    %v1053 = vunpack.c.h.b16 %v735
    %v1054 = vunpack.c.l.b16 %v736
    %v1055 = vunpack.c.l.b16 %v737
    %v1056 = vunpack.c.h.b16 %v737
    %v1057 = vunpack.c.l.b16 %v738
    %v1058 = vunpack.c.l.b16 %v739
    %v1059 = vunpack.c.h.b16 %v739
    %v1060 = vunpack.c.l.b16 %v740
    %v1061 = vunpack.c.l.b16 %v741
    %v1062 = vunpack.c.h.b16 %v741
    %v1063 = vunpack.c.l.b16 %v742
    %v1064 = vpack.c.b16 %v875, %v872
    %v1065 = vpack.c.b16 %v876, %v873
    %v1066 = vpack.c.b16 %v877, %v874
    %v1067 = vpack.c.b16 %v881, %v878
    %v1068 = vpack.c.b16 %v882, %v879
    %v1069 = vpack.c.b16 %v883, %v880
    %v1070 = vpack.c.b16 %v887, %v884
    %v1071 = vpack.c.b16 %v888, %v885
    %v1072 = vpack.c.b16 %v889, %v886
    %v1073 = vpack.c.b16 %v893, %v890
    %v1074 = vpack.c.b16 %v894, %v891
    %v1075 = vpack.c.b16 %v895, %v892
    %v1076 = vpack.c.b16 %v899, %v896
    %v1077 = vpack.c.b16 %v900, %v897
    %v1078 = vpack.c.b16 %v901, %v898
    %v1079 = vpack.c.b16 %v905, %v902
    %v1080 = vpack.c.b16 %v906, %v903
    %v1081 = vpack.c.b16 %v907, %v904
    %v1082 = vpack.c.b16 %v911, %v908
    %v1083 = vpack.c.b16 %v912, %v909
    %v1084 = vpack.c.b16 %v913, %v910
    %v1085 = vpack.c.b16 %v917, %v914
    %v1086 = vpack.c.b16 %v918, %v915
    %v1087 = vpack.c.b16 %v919, %v916
    %v1088 = vpack.c.b16 %v923, %v920
    %v1089 = vpack.c.b16 %v924, %v921
    %v1090 = vpack.c.b16 %v925, %v922
    %v1091 = vpack.c.b16 %v929, %v926
    %v1092 = vpack.c.b16 %v930, %v927
    %v1093 = vpack.c.b16 %v931, %v928
    %v1094 = vpack.c.b16 %v935, %v932
    %v1095 = vpack.c.b16 %v936, %v933
    %v1096 = vpack.c.b16 %v937, %v934
    %v1097 = vpack.c.b16 %v941, %v938
    %v1098 = vpack.c.b16 %v942, %v939
    %v1099 = vpack.c.b16 %v943, %v940
    %v1100 = vpack.c.b16 %v947, %v944
    %v1101 = vpack.c.b16 %v948, %v945
    %v1102 = vpack.c.b16 %v949, %v946
    %v1103 = vpack.c.b16 %v953, %v950
    %v1104 = vpack.c.b16 %v954, %v951
    %v1105 = vpack.c.b16 %v955, %v952
    %v1106 = vpack.c.b16 %v959, %v956
    %v1107 = vpack.c.b16 %v960, %v957
    %v1108 = vpack.c.b16 %v961, %v958
    %v1109 = vpack.c.b16 %v965, %v962
    %v1110 = vpack.c.b16 %v966, %v963
    %v1111 = vpack.c.b16 %v967, %v964
    %v1112 = vpack.c.b16 %v971, %v968
    %v1113 = vpack.c.b16 %v972, %v969
    %v1114 = vpack.c.b16 %v973, %v970
    %v1115 = vpack.c.b16 %v977, %v974
    %v1116 = vpack.c.b16 %v978, %v975
    %v1117 = vpack.c.b16 %v979, %v976
    %v1118 = vpack.c.b16 %v983, %v980
    %v1119 = vpack.c.b16 %v984, %v981
    %v1120 = vpack.c.b16 %v985, %v982
    %v1121 = vpack.c.b16 %v989, %v986
    %v1122 = vpack.c.b16 %v990, %v987
    %v1123 = vpack.c.b16 %v991, %v988
    %v1124 = vpack.c.b16 %v995, %v992
    %v1125 = vpack.c.b16 %v996, %v993
    %v1126 = vpack.c.b16 %v997, %v994
    %v1127 = vpack.c.b16 %v1001, %v998
    %v1128 = vpack.c.b16 %v1002, %v999
    %v1129 = vpack.c.b16 %v1003, %v1000
    %v1130 = vpack.c.b16 %v1007, %v1004
    %v1131 = vpack.c.b16 %v1008, %v1005
    %v1132 = vpack.c.b16 %v1009, %v1006
    %v1133 = vpack.c.b16 %v1013, %v1010
    %v1134 = vpack.c.b16 %v1014, %v1011
    %v1135 = vpack.c.b16 %v1015, %v1012
    %v1136 = vpack.c.b16 %v1019, %v1016
    %v1137 = vpack.c.b16 %v1020, %v1017
    %v1138 = vpack.c.b16 %v1021, %v1018
    %v1139 = vpack.c.b16 %v1025, %v1022
    %v1140 = vpack.c.b16 %v1026, %v1023
    %v1141 = vpack.c.b16 %v1027, %v1024
    %v1142 = vpack.c.b16 %v1031, %v1028
    %v1143 = vpack.c.b16 %v1032, %v1029
    %v1144 = vpack.c.b16 %v1033, %v1030
    %v1145 = vpack.c.b16 %v1037, %v1034
    %v1146 = vpack.c.b16 %v1038, %v1035
    %v1147 = vpack.c.b16 %v1039, %v1036
    %v1148 = vpack.c.b16 %v1043, %v1040
    %v1149 = vpack.c.b16 %v1044, %v1041
    %v1150 = vpack.c.b16 %v1045, %v1042
    %v1151 = vpack.c.b16 %v1049, %v1046
    %v1152 = vpack.c.b16 %v1050, %v1047
    %v1153 = vpack.c.b16 %v1051, %v1048
    %v1154 = vpack.c.b16 %v1055, %v1052
    %v1155 = vpack.c.b16 %v1056, %v1053
    %v1156 = vpack.c.b16 %v1057, %v1054
    %v1157 = vpack.c.b16 %v1061, %v1058
    %v1158 = vpack.c.b16 %v1062, %v1059
    %v1159 = vpack.c.b16 %v1063, %v1060
    %v1257 = vperm.slane %v743, 0
    %v1258 = vperm.slane %v743, 1
    %v1259 = vperm.slane %v743, 2
    %1263 = vmatpush.bf16.msra.mxu0 %v1085
    %1264 = vmatpush.bf16.msra.mxu0 %v1082
    %1265 = vmatpush.bf16.msra.mxu0 %v1079
    %1266 = vmatpush.bf16.msra.mxu0 %v1076
    %1267 = vmatpush.bf16.msra.mxu0 %v1073
    %1268 = vmatpush.bf16.msra.mxu0 %v1070
    %1269 = vmatpush.bf16.msra.mxu0 %v1067
    %1270 = vmatpush.bf16.msra.mxu0 %v1064
    %1271 = vmatmul.bf16.gmra.mxu0 %v611
    %v1272 = vpop.f32.mrf.mxu0
    %v1273 = vadd.f32 %v1257, %v1272
    %v1274 = vpop.f32.mrf.mxu0
    %1275 = vdwg.mxu0
    %1276 = vmatpush.bf16.msra.mxu0 %v1109
    %1277 = vmatpush.bf16.msra.mxu0 %v1106
    %1278 = vmatpush.bf16.msra.mxu0 %v1103
    %1279 = vmatpush.bf16.msra.mxu0 %v1100
    %1280 = vmatpush.bf16.msra.mxu0 %v1097
    %1281 = vmatpush.bf16.msra.mxu0 %v1094
    %1282 = vmatpush.bf16.msra.mxu0 %v1091
    %1283 = vmatpush.bf16.msra.mxu0 %v1088
    %1284 = vmatmul.bf16.gmra.mxu0 %v612
    %v1285 = vpop.f32.mrf.mxu0
    %v1286 = vadd.f32 %v1273, %v1285
    %v1287 = vpop.f32.mrf.mxu0
    %1288 = vdwg.mxu0
    %1289 = vmatpush.bf16.msra.mxu0 %v1133
    %1290 = vmatpush.bf16.msra.mxu0 %v1130
    %1291 = vmatpush.bf16.msra.mxu0 %v1127
    %1292 = vmatpush.bf16.msra.mxu0 %v1124
    %1293 = vmatpush.bf16.msra.mxu0 %v1121
    %1294 = vmatpush.bf16.msra.mxu0 %v1118
    %1295 = vmatpush.bf16.msra.mxu0 %v1115
    %1296 = vmatpush.bf16.msra.mxu0 %v1112
    %1297 = vmatmul.bf16.gmra.mxu0 %v613
    %v1298 = vpop.f32.mrf.mxu0
    %v1299 = vadd.f32 %v1286, %v1298
    %v1300 = vpop.f32.mrf.mxu0
    %1301 = vdwg.mxu0
    %1302 = vmatpush.bf16.msra.mxu0 %v1157
    %1303 = vmatpush.bf16.msra.mxu0 %v1154
    %1304 = vmatpush.bf16.msra.mxu0 %v1151
    %1305 = vmatpush.bf16.msra.mxu0 %v1148
    %1306 = vmatpush.bf16.msra.mxu0 %v1145
    %1307 = vmatpush.bf16.msra.mxu0 %v1142
    %1308 = vmatpush.bf16.msra.mxu0 %v1139
    %1309 = vmatpush.bf16.msra.mxu0 %v1136
    %1310 = vmatmul.bf16.gmra.mxu0 %v614
    %v1311 = vpop.f32.mrf.mxu0
    %v1312 = vadd.f32 %v1299, %v1311
    %v1313 = vpop.f32.mrf.mxu0
    %1314 = vdwg.mxu0
    %1315 = vmatpush.bf16.msra.mxu0 %v1086
    %1316 = vmatpush.bf16.msra.mxu0 %v1083
    %1317 = vmatpush.bf16.msra.mxu0 %v1080
    %1318 = vmatpush.bf16.msra.mxu0 %v1077
    %1319 = vmatpush.bf16.msra.mxu0 %v1074
    %1320 = vmatpush.bf16.msra.mxu0 %v1071
    %1321 = vmatpush.bf16.msra.mxu0 %v1068
    %1322 = vmatpush.bf16.msra.mxu0 %v1065
    %1323 = vmatmul.bf16.gmra.mxu0 %v611
    %v1324 = vpop.f32.mrf.mxu0
    %v1325 = vadd.f32 %v1258, %v1324
    %v1326 = vpop.f32.mrf.mxu0
    %1327 = vdwg.mxu0
    %1328 = vmatpush.bf16.msra.mxu0 %v1110
    %1329 = vmatpush.bf16.msra.mxu0 %v1107
    %1330 = vmatpush.bf16.msra.mxu0 %v1104
    %1331 = vmatpush.bf16.msra.mxu0 %v1101
    %1332 = vmatpush.bf16.msra.mxu0 %v1098
    %1333 = vmatpush.bf16.msra.mxu0 %v1095
    %1334 = vmatpush.bf16.msra.mxu0 %v1092
    %1335 = vmatpush.bf16.msra.mxu0 %v1089
    %1336 = vmatmul.bf16.gmra.mxu0 %v612
    %v1337 = vpop.f32.mrf.mxu0
    %v1338 = vadd.f32 %v1325, %v1337
    %v1339 = vpop.f32.mrf.mxu0
    %1340 = vdwg.mxu0
    %1341 = vmatpush.bf16.msra.mxu0 %v1134
    %1342 = vmatpush.bf16.msra.mxu0 %v1131
    %1343 = vmatpush.bf16.msra.mxu0 %v1128
    %1344 = vmatpush.bf16.msra.mxu0 %v1125
    %1345 = vmatpush.bf16.msra.mxu0 %v1122
    %1346 = vmatpush.bf16.msra.mxu0 %v1119
    %1347 = vmatpush.bf16.msra.mxu0 %v1116
    %1348 = vmatpush.bf16.msra.mxu0 %v1113
    %1349 = vmatmul.bf16.gmra.mxu0 %v613
    %v1350 = vpop.f32.mrf.mxu0
    %v1351 = vadd.f32 %v1338, %v1350
    %v1352 = vpop.f32.mrf.mxu0
    %1353 = vdwg.mxu0
    %1354 = vmatpush.bf16.msra.mxu0 %v1158
    %1355 = vmatpush.bf16.msra.mxu0 %v1155
    %1356 = vmatpush.bf16.msra.mxu0 %v1152
    %1357 = vmatpush.bf16.msra.mxu0 %v1149
    %1358 = vmatpush.bf16.msra.mxu0 %v1146
    %1359 = vmatpush.bf16.msra.mxu0 %v1143
    %1360 = vmatpush.bf16.msra.mxu0 %v1140
    %1361 = vmatpush.bf16.msra.mxu0 %v1137
    %1362 = vmatmul.bf16.gmra.mxu0 %v614
    %v1363 = vpop.f32.mrf.mxu0
    %v1364 = vadd.f32 %v1351, %v1363
    %v1365 = vpop.f32.mrf.mxu0
    %1366 = vdwg.mxu0
    %1367 = vmatpush.bf16.msra.mxu0 %v1087
    %1368 = vmatpush.bf16.msra.mxu0 %v1084
    %1369 = vmatpush.bf16.msra.mxu0 %v1081
    %1370 = vmatpush.bf16.msra.mxu0 %v1078
    %1371 = vmatpush.bf16.msra.mxu0 %v1075
    %1372 = vmatpush.bf16.msra.mxu0 %v1072
    %1373 = vmatpush.bf16.msra.mxu0 %v1069
    %1374 = vmatpush.bf16.msra.mxu0 %v1066
    %1375 = vmatmul.bf16.gmra.mxu0 %v611
    %v1376 = vpop.f32.mrf.mxu0
    %v1377 = vadd.f32 %v1259, %v1376
    %v1378 = vpop.f32.mrf.mxu0
    %1379 = vdwg.mxu0
    %1380 = vmatpush.bf16.msra.mxu0 %v1111
    %1381 = vmatpush.bf16.msra.mxu0 %v1108
    %1382 = vmatpush.bf16.msra.mxu0 %v1105
    %1383 = vmatpush.bf16.msra.mxu0 %v1102
    %1384 = vmatpush.bf16.msra.mxu0 %v1099
    %1385 = vmatpush.bf16.msra.mxu0 %v1096
    %1386 = vmatpush.bf16.msra.mxu0 %v1093
    %1387 = vmatpush.bf16.msra.mxu0 %v1090
    %1388 = vmatmul.bf16.gmra.mxu0 %v612
    %v1389 = vpop.f32.mrf.mxu0
    %v1390 = vadd.f32 %v1377, %v1389
    %v1391 = vpop.f32.mrf.mxu0
    %1392 = vdwg.mxu0
    %1393 = vmatpush.bf16.msra.mxu0 %v1135
    %1394 = vmatpush.bf16.msra.mxu0 %v1132
    %1395 = vmatpush.bf16.msra.mxu0 %v1129
    %1396 = vmatpush.bf16.msra.mxu0 %v1126
    %1397 = vmatpush.bf16.msra.mxu0 %v1123
    %1398 = vmatpush.bf16.msra.mxu0 %v1120
    %1399 = vmatpush.bf16.msra.mxu0 %v1117
    %1400 = vmatpush.bf16.msra.mxu0 %v1114
    %1401 = vmatmul.bf16.gmra.mxu0 %v613
    %v1402 = vpop.f32.mrf.mxu0
    %v1403 = vadd.f32 %v1390, %v1402
    %v1404 = vpop.f32.mrf.mxu0
    %1405 = vdwg.mxu0
    %1406 = vmatpush.bf16.msra.mxu0 %v1159
    %1407 = vmatpush.bf16.msra.mxu0 %v1156
    %1408 = vmatpush.bf16.msra.mxu0 %v1153
    %1409 = vmatpush.bf16.msra.mxu0 %v1150
    %1410 = vmatpush.bf16.msra.mxu0 %v1147
    %1411 = vmatpush.bf16.msra.mxu0 %v1144
    %1412 = vmatpush.bf16.msra.mxu0 %v1141
    %1413 = vmatpush.bf16.msra.mxu0 %v1138
    %1414 = vmatmul.bf16.gmra.mxu0 %v614
    %v1415 = vpop.f32.mrf.mxu0
    %v1416 = vadd.f32 %v1403, %v1415
    %v1417 = vpop.f32.mrf.mxu0
    %1418 = vdwg.mxu0
    %v1419 = vmax.f32 %v1312, 0.0
    %v1420 = vmax.f32 %v1364, 0.0
    %v1421 = vmax.f32 %v1416, 0.0
    %v1422 = vpack.c.bf16 %v1419, %v1419
    %v1423 = vpack.c.bf16 %v1420, %v1420
    %v1424 = vpack.c.bf16 %v1421, %v1421
    %v1425 = vld [vmem:[#allocation10] sm:$0xf]
    %v1426 = vld [vmem:[#allocation10 + $0x4] sm:$0xf]
    %v1427 = vld [vmem:[#allocation10 + $0x8] sm:$0xf]
    %v1428 = vld [vmem:[#allocation10 + $0xc] sm:$0xf]
    %v1429 = vld [vmem:[#allocation10 + $0x10] sm:$0xf]
    %v1430 = vld [vmem:[#allocation10 + $0x14] sm:$0xf]
    %v1431 = vld [vmem:[#allocation10 + $0x18] sm:$0xf]
    %v1432 = vld [vmem:[#allocation10 + $0x1c] sm:$0xf]
    %v1433 = vld [vmem:[#allocation10 + $0x20] sm:$0xf]
    %v1434 = vld [vmem:[#allocation10 + $0x24] sm:$0xf]
    %v1435 = vld [vmem:[#allocation10 + $0x28] sm:$0xf]
    %v1436 = vld [vmem:[#allocation10 + $0x2c] sm:$0xf]
    %v1437 = vld [vmem:[#allocation10 + $0x30] sm:$0xf]
    %v1438 = vld [vmem:[#allocation10 + $0x34] sm:$0xf]
    %v1439 = vld [vmem:[#allocation10 + $0x38] sm:$0xf]
    %v1440 = vld [vmem:[#allocation10 + $0x3c] sm:$0xf]
    %v1441 = vld [vmem:[#allocation10 + $0x40] sm:$0xf]
    %v1442 = vld [vmem:[#allocation10 + $0x44] sm:$0xf]
    %v1443 = vld [vmem:[#allocation10 + $0x48] sm:$0xf]
    %v1444 = vld [vmem:[#allocation10 + $0x4c] sm:$0xf]
    %v1445 = vld [vmem:[#allocation10 + $0x50] sm:$0xf]
    %v1446 = vld [vmem:[#allocation10 + $0x54] sm:$0xf]
    %v1447 = vld [vmem:[#allocation10 + $0x58] sm:$0xf]
    %v1448 = vld [vmem:[#allocation10 + $0x5c] sm:$0xf]
    %v1449 = vld [vmem:[#allocation10 + $0x60] sm:$0xf]
    %v1450 = vld [vmem:[#allocation10 + $0x64] sm:$0xf]
    %v1451 = vld [vmem:[#allocation10 + $0x68] sm:$0xf]
    %v1452 = vld [vmem:[#allocation10 + $0x6c] sm:$0xf]
    %v1453 = vld [vmem:[#allocation10 + $0x70] sm:$0xf]
    %v1454 = vld [vmem:[#allocation10 + $0x74] sm:$0xf]
    %v1455 = vld [vmem:[#allocation10 + $0x78] sm:$0xf]
    %v1456 = vld [vmem:[#allocation10 + $0x7c] sm:$0xf]
    %v1457 = vld [vmem:[#allocation10 + $0x80] sm:$0xf]
    %v1458 = vld [vmem:[#allocation10 + $0x84] sm:$0xf]
    %v1459 = vld [vmem:[#allocation10 + $0x88] sm:$0xf]
    %v1460 = vld [vmem:[#allocation10 + $0x8c] sm:$0xf]
    %v1461 = vld [vmem:[#allocation10 + $0x90] sm:$0xf]
    %v1462 = vld [vmem:[#allocation10 + $0x94] sm:$0xf]
    %v1463 = vld [vmem:[#allocation10 + $0x98] sm:$0xf]
    %v1464 = vld [vmem:[#allocation10 + $0x9c] sm:$0xf]
    %v1465 = vld [vmem:[#allocation10 + $0xa0] sm:$0xf]
    %v1466 = vld [vmem:[#allocation10 + $0xa4] sm:$0xf]
    %v1467 = vld [vmem:[#allocation10 + $0xa8] sm:$0xf]
    %v1468 = vld [vmem:[#allocation10 + $0xac] sm:$0xf]
    %v1469 = vld [vmem:[#allocation10 + $0xb0] sm:$0xf]
    %v1470 = vld [vmem:[#allocation10 + $0xb4] sm:$0xf]
    %v1471 = vld [vmem:[#allocation10 + $0xb8] sm:$0xf]
    %v1472 = vld [vmem:[#allocation10 + $0xbc] sm:$0xf]
    %v1473 = vld [vmem:[%s6] sm:$0x1]
    %v1522 = vunpack.c.l.b16 %v1425
    %v1523 = vunpack.c.l.b16 %v1426
    %v1524 = vunpack.c.l.b16 %v1427
    %v1525 = vunpack.c.l.b16 %v1428
    %v1526 = vunpack.c.l.b16 %v1429
    %v1527 = vunpack.c.l.b16 %v1430
    %v1528 = vunpack.c.l.b16 %v1431
    %v1529 = vunpack.c.l.b16 %v1432
    %v1530 = vunpack.c.l.b16 %v1433
    %v1531 = vunpack.c.l.b16 %v1434
    %v1532 = vunpack.c.l.b16 %v1435
    %v1533 = vunpack.c.l.b16 %v1436
    %v1534 = vunpack.c.l.b16 %v1437
    %v1535 = vunpack.c.l.b16 %v1438
    %v1536 = vunpack.c.l.b16 %v1439
    %v1537 = vunpack.c.l.b16 %v1440
    %v1538 = vunpack.c.l.b16 %v1441
    %v1539 = vunpack.c.l.b16 %v1442
    %v1540 = vunpack.c.l.b16 %v1443
    %v1541 = vunpack.c.l.b16 %v1444
    %v1542 = vunpack.c.l.b16 %v1445
    %v1543 = vunpack.c.l.b16 %v1446
    %v1544 = vunpack.c.l.b16 %v1447
    %v1545 = vunpack.c.l.b16 %v1448
    %v1546 = vunpack.c.l.b16 %v1449
    %v1547 = vunpack.c.l.b16 %v1450
    %v1548 = vunpack.c.l.b16 %v1451
    %v1549 = vunpack.c.l.b16 %v1452
    %v1550 = vunpack.c.l.b16 %v1453
    %v1551 = vunpack.c.l.b16 %v1454
    %v1552 = vunpack.c.l.b16 %v1455
    %v1553 = vunpack.c.l.b16 %v1456
    %v1554 = vunpack.c.l.b16 %v1457
    %v1555 = vunpack.c.l.b16 %v1458
    %v1556 = vunpack.c.l.b16 %v1459
    %v1557 = vunpack.c.l.b16 %v1460
    %v1558 = vunpack.c.l.b16 %v1461
    %v1559 = vunpack.c.l.b16 %v1462
    %v1560 = vunpack.c.l.b16 %v1463
    %v1561 = vunpack.c.l.b16 %v1464
    %v1562 = vunpack.c.l.b16 %v1465
    %v1563 = vunpack.c.l.b16 %v1466
    %v1564 = vunpack.c.l.b16 %v1467
    %v1565 = vunpack.c.l.b16 %v1468
    %v1566 = vunpack.c.l.b16 %v1469
    %v1567 = vunpack.c.l.b16 %v1470
    %v1568 = vunpack.c.l.b16 %v1471
    %v1569 = vunpack.c.l.b16 %v1472
    %v1570 = vpack.c.b16 %v1523, %v1522
    %v1571 = vpack.c.b16 %v1525, %v1524
    %v1572 = vpack.c.b16 %v1527, %v1526
    %v1573 = vpack.c.b16 %v1529, %v1528
    %v1574 = vpack.c.b16 %v1531, %v1530
    %v1575 = vpack.c.b16 %v1533, %v1532
    %v1576 = vpack.c.b16 %v1535, %v1534
    %v1577 = vpack.c.b16 %v1537, %v1536
    %v1578 = vpack.c.b16 %v1539, %v1538
    %v1579 = vpack.c.b16 %v1541, %v1540
    %v1580 = vpack.c.b16 %v1543, %v1542
    %v1581 = vpack.c.b16 %v1545, %v1544
    %v1582 = vpack.c.b16 %v1547, %v1546
    %v1583 = vpack.c.b16 %v1549, %v1548
    %v1584 = vpack.c.b16 %v1551, %v1550
    %v1585 = vpack.c.b16 %v1553, %v1552
    %v1586 = vpack.c.b16 %v1555, %v1554
    %v1587 = vpack.c.b16 %v1557, %v1556
    %v1588 = vpack.c.b16 %v1559, %v1558
    %v1589 = vpack.c.b16 %v1561, %v1560
    %v1590 = vpack.c.b16 %v1563, %v1562
    %v1591 = vpack.c.b16 %v1565, %v1564
    %v1592 = vpack.c.b16 %v1567, %v1566
    %v1593 = vpack.c.b16 %v1569, %v1568
    %1618 = vmatpush.bf16.msra.mxu0 %v1577
    %1619 = vmatpush.bf16.msra.mxu0 %v1576
    %1620 = vmatpush.bf16.msra.mxu0 %v1575
    %1621 = vmatpush.bf16.msra.mxu0 %v1574
    %1622 = vmatpush.bf16.msra.mxu0 %v1573
    %1623 = vmatpush.bf16.msra.mxu0 %v1572
    %1624 = vmatpush.bf16.msra.mxu0 %v1571
    %1625 = vmatpush.bf16.msra.mxu0 %v1570
    %1626 = vmatmul.bf16.gmra.mxu0 %v1422
    %v1627 = vpop.f32.mrf.mxu0
    %v1628 = vadd.f32 %v1473, %v1627
    %v1629 = vpop.f32.mrf.mxu0
    %1630 = vdwg.mxu0
    %1631 = vmatpush.bf16.msra.mxu0 %v1585
    %1632 = vmatpush.bf16.msra.mxu0 %v1584
    %1633 = vmatpush.bf16.msra.mxu0 %v1583
    %1634 = vmatpush.bf16.msra.mxu0 %v1582
    %1635 = vmatpush.bf16.msra.mxu0 %v1581
    %1636 = vmatpush.bf16.msra.mxu0 %v1580
    %1637 = vmatpush.bf16.msra.mxu0 %v1579
    %1638 = vmatpush.bf16.msra.mxu0 %v1578
    %1639 = vmatmul.bf16.gmra.mxu0 %v1423
    %v1640 = vpop.f32.mrf.mxu0
    %v1641 = vadd.f32 %v1628, %v1640
    %v1642 = vpop.f32.mrf.mxu0
    %1643 = vdwg.mxu0
    %1644 = vmatpush.bf16.msra.mxu0 %v1593
    %1645 = vmatpush.bf16.msra.mxu0 %v1592
    %1646 = vmatpush.bf16.msra.mxu0 %v1591
    %1647 = vmatpush.bf16.msra.mxu0 %v1590
    %1648 = vmatpush.bf16.msra.mxu0 %v1589
    %1649 = vmatpush.bf16.msra.mxu0 %v1588
    %1650 = vmatpush.bf16.msra.mxu0 %v1587
    %1651 = vmatpush.bf16.msra.mxu0 %v1586
    %1652 = vmatmul.bf16.gmra.mxu0 %v1424
    %v1653 = vpop.f32.mrf.mxu0
    %v1654 = vadd.f32 %v1641, %v1653
    %v1655 = vpop.f32.mrf.mxu0
    %1656 = vdwg.mxu0
    %v1657 = vsub.f32 0.0, %v1654
    %v1658 = vmul.f32 %v1657, 1.442695
    %v1659 = vpow.pop %v1658
    %v1660 = vadd.f32 %v1659, 1.0
    %v1661 = vrcp.pop %v1660
    %1662 = vst [vmem:[#allocation11] sm:$0x1] %v1661
    // Predicated region
    $region50: #{tpu_custom_call.1} parent=1 // pred_check
      _
    $region51: #{tpu_custom_call.1} parent=1 // pred_check_branch
      %1664 = sbr.rel (0) target = $region53
    $region52: #{tpu_custom_call.1} parent=1 // pred_region
      %1666 = vsyncadd [#allocation4], 0
      %s1668 = sshll.u32 [#allocation11], 4
      %s1669 = int_to_ptr.vmem [resolvable:$true] %s1668
      %s1670 = sshll.u32 %s7, 4
      %s1671 = int_to_ptr.hbm [resolvable:$true] %s1670
      %1673 = dma.vmem_to_hbm [thread:$0]  %s1669, 16, %s1671, [#allocation4]
    $region53: #{tpu_custom_call.1} parent=1 // pred_fallthru
      _
    // Predicated region
    $region54: #{tpu_custom_call.1} parent=1 // pred_check
      _
    $region55: #{tpu_custom_call.1} parent=1 // pred_check_branch
      %1675 = sbr.rel (0) target = $region57
    $region56: #{tpu_custom_call.1} parent=1 // pred_region
      %1677 = dma.done [#allocation4], 16
    $region57: #{tpu_custom_call.1} parent=1 // pred_fallthru
      _
    %1678 = vsyncpa [#allocation3], 1
    %1679 = vsyncpa [#allocation6], 1
    %1680 = vsyncpa [#allocation9], 1
    %1681 = vsyncpa [#allocation4], 1

</llo_original>
